<compile_context>
chip_gen: v5e
topology: v5e:2x2
jax: 0.10.0
libtpu: 0.0.40
codegen_flags: <defaults>
</compile_context>

<pallas_src>
import functools

import jax
import jax.numpy as jnp
from jax.experimental import pallas as pl
from jax.experimental.pallas import tpu as pltpu

EPS = 1e-5


def conv_bn_kernel(x_ref, w_ref, gb_ref, o_ref, *, m_true):
    # x_ref:  (Cin, M)          flattened input (channels-major), resident
    # w_ref:  (tile_cout, Cin)  1x1 conv weight tile
    # gb_ref: (tile_cout, 2)    column 0 = gamma, column 1 = beta
    # o_ref:  (tile_cout, M)
    x = x_ref[...]
    w = w_ref[...]

    # 1x1 conv == matmul on the MXU, f32 accumulation.
    y = jnp.dot(w, x, preferred_element_type=jnp.float32)          # (tn, M)

    # BatchNorm2d training-mode batch statistics over M = N*H*W, per channel.
    # Do the two cross-lane reductions on the MXU (dot with a ones column)
    # instead of paying an XLU lane-reduce tail on the last grid step.
    ones_m = jnp.ones((y.shape[1], 1), dtype=jnp.float32)
    inv_m = 1.0 / float(m_true)
    s1 = jnp.dot(y, ones_m, preferred_element_type=jnp.float32)     # (tn, 1)
    s2 = jnp.dot(y * y, ones_m, preferred_element_type=jnp.float32) # (tn, 1)
    mean = s1 * inv_m
    var = jnp.maximum(s2 * inv_m - mean * mean, 0.0)  # biased var (PyTorch BN)

    # Fold BN into per-channel scale/shift -> only 2 elementwise ops on y.
    gamma = gb_ref[:, 0:1]
    beta = gb_ref[:, 1:2]
    scale = gamma * jax.lax.rsqrt(var + EPS)                        # (tn, 1)
    shift = beta - mean * scale                                     # (tn, 1)

    o_ref[...] = y * scale + shift


def conv2d_batchnorm(x_nchw, w_conv, gamma, beta, *, n_cout_tiles=4):
    """x_nchw: (N, Cin, H, W); w_conv: (Cout, Cin, 1, 1); gamma/beta: (Cout,)"""
    N, Cin, H, W = x_nchw.shape
    Cout = w_conv.shape[0]
    M = N * H * W

    # Channels-major 2D views.  For N == 1 these are free reshapes (no copy).
    if N == 1:
        x2d = x_nchw.reshape(Cin, M)
    else:
        x2d = jnp.moveaxis(x_nchw, 1, 0).reshape(Cin, M)
    w2d = w_conv.reshape(Cout, Cin)
    gb = jnp.stack([gamma, beta], axis=1)          # (Cout, 2): one small DMA

    # Deepest requested Cout tiling keeping tn a multiple of 8 (sublane rule).
    # Default 4 (tn = 264 for Cout = 1056): 2 steps per TC on v7x, and enough
    # grid steps on v5e/v6e to overlap W-tile DMA / output writeback with
    # compute, without paying too many ~0.35 us per-step overheads.
    n_tiles = 1
    for cand in range(max(1, n_cout_tiles), 0, -1):
        if Cout % cand == 0 and (Cout // cand) % 8 == 0:
            n_tiles = cand
            break
    tn = Cout // n_tiles

    kernel = functools.partial(conv_bn_kernel, m_true=M)

    cost = pl.CostEstimate(
        flops=2 * Cout * Cin * M + 4 * Cout * M,      # conv matmul + stat dots
        bytes_accessed=4 * (Cin * M + Cout * Cin + 2 * Cout + Cout * M),
        transcendentals=Cout,                          # per-channel rsqrt
    )

    out2d = pl.pallas_call(
        kernel,
        out_shape=jax.ShapeDtypeStruct((Cout, M), jnp.float32),
        grid=(n_tiles,),
        in_specs=[
            pl.BlockSpec((Cin, M), lambda j: (0, 0)),   # x resident across tiles
            pl.BlockSpec((tn, Cin), lambda j: (j, 0)),  # weight tile
            pl.BlockSpec((tn, 2), lambda j: (j, 0)),    # packed gamma/beta tile
        ],
        out_specs=pl.BlockSpec((tn, M), lambda j: (j, 0)),
        compiler_params=pltpu.CompilerParams(
            dimension_semantics=("parallel",)
        ),
        cost_estimate=cost,
    )(x2d, w2d, gb)

    # (Cout, M) -> NCHW; free reshape for N == 1.
    if N == 1:
        return out2d.reshape(1, Cout, H, W)
    return jnp.moveaxis(out2d.reshape(Cout, N, H, W), 0, 1)


def reference(x_nchw, w_conv, gamma, beta):
    # Pure-JAX reference (two-pass BN stats) for sanity checking.
    N, Cin, H, W = x_nchw.shape
    Cout = w_conv.shape[0]
    x2d = jnp.transpose(x_nchw, (0, 2, 3, 1)).reshape(-1, Cin)
    y = x2d @ jnp.transpose(w_conv.reshape(Cout, Cin))
    mean = jnp.mean(y, axis=0, keepdims=True)
    var = jnp.mean((y - mean) ** 2, axis=0, keepdims=True)
    out = (y - mean) / jnp.sqrt(var + EPS) * gamma[None, :] + beta[None, :]
    return jnp.transpose(out.reshape(N, H, W, Cout), (0, 3, 1, 2))


if __name__ == "__main__":
    key = jax.random.PRNGKey(0)
    k_x, k_w, k_g, k_b = jax.random.split(key, 4)

    N, Cin, H, W, Cout = 1, 176, 14, 14, 1056

    x = jax.random.normal(k_x, (N, Cin, H, W), dtype=jnp.float32)
    # Conv2d weight (Cout, Cin, 1, 1), bias=False
    w = jax.random.normal(k_w, (Cout, Cin, 1, 1), dtype=jnp.float32) * 0.05
    # BatchNorm2d affine parameters
    gamma = 1.0 + 0.1 * jax.random.normal(k_g, (Cout,), dtype=jnp.float32)
    beta = 0.1 * jax.random.normal(k_b, (Cout,), dtype=jnp.float32)

    # TODO(synk): BatchNorm running_mean/var momentum update (training-time
    # buffer side effect) is not emitted; the returned activation is unaffected.

    out = conv2d_batchnorm(x, w, gamma, beta)
    out = jax.block_until_ready(out)

    ref = reference(x, w, gamma, beta)
    assert out.shape == (N, Cout, H, W)
    assert jnp.allclose(out, ref, atol=1e-3, rtol=1e-3)

    print("KERNEL_OK")
</pallas_src>

<mosaic_0001>
module attributes {stable_mosaic.version = 11 : i64} {
  func.func @conv_bn_kernel(%arg0: i32, %arg1: memref<176x196xf32, #tpu.memory_space<vmem>>, %arg2: memref<264x176xf32, #tpu.memory_space<vmem>>, %arg3: memref<264x2xf32, #tpu.memory_space<vmem>>, %arg4: memref<264x196xf32, #tpu.memory_space<vmem>>) attributes {dimension_semantics = [#tpu.dimension_semantics<parallel>], iteration_bounds = array<i64: 4>, scalar_prefetch = 0 : i64, scratch_operands = 0 : i64, tpu.core_type = #tpu.core_type<tc>, window_params = [{pipeline_mode = #tpu.pipeline_mode<synchronous>, transform_indices = @transform_0, window_bounds = array<i64: 176, 196>}, {transform_indices = @transform_1, window_bounds = array<i64: 264, 176>}, {transform_indices = @transform_2, window_bounds = array<i64: 264, 2>}, {transform_indices = @transform_3, window_bounds = array<i64: 264, 196>}]} {
    %c0 = arith.constant 0 : index
    %c0_0 = arith.constant 0 : index
    %0 = vector.load %arg1[%c0, %c0_0] : memref<176x196xf32, #tpu.memory_space<vmem>>, vector<176x196xf32>
    %c0_1 = arith.constant 0 : index
    %c0_2 = arith.constant 0 : index
    %1 = vector.load %arg2[%c0_1, %c0_2] : memref<264x176xf32, #tpu.memory_space<vmem>>, vector<264x176xf32>
    %cst = arith.constant dense<0.000000e+00> : vector<264x196xf32>
    %2 = tpu.matmul %1, %0, %cst {dimension_numbers = #tpu.dot_dimension_numbers<[1], [0], [0], [1], [0, 0, 1, 1], [], []>} : vector<264x176xf32>, vector<176x196xf32>, vector<264x196xf32> -> vector<264x196xf32>
    %cst_3 = arith.constant 1.000000e+00 : f32
    %3 = vector.broadcast %cst_3 : f32 to vector<196x1xf32>
    %cst_4 = arith.constant dense<0.000000e+00> : vector<264x1xf32>
    %4 = tpu.matmul %2, %3, %cst_4 {dimension_numbers = #tpu.dot_dimension_numbers<[1], [0], [0], [1], [0, 0, 1, 1], [], []>} : vector<264x196xf32>, vector<196x1xf32>, vector<264x1xf32> -> vector<264x1xf32>
    %5 = arith.mulf %2, %2 : vector<264x196xf32>
    %cst_5 = arith.constant dense<0.000000e+00> : vector<264x1xf32>
    %6 = tpu.matmul %5, %3, %cst_5 {dimension_numbers = #tpu.dot_dimension_numbers<[1], [0], [0], [1], [0, 0, 1, 1], [], []>} : vector<264x196xf32>, vector<196x1xf32>, vector<264x1xf32> -> vector<264x1xf32>
    %cst_6 = arith.constant 0.00510204071 : f32
    %7 = vector.broadcast %cst_6 : f32 to vector<264x1xf32>
    %8 = arith.mulf %4, %7 : vector<264x1xf32>
    %cst_7 = arith.constant 0.00510204071 : f32
    %9 = vector.broadcast %cst_7 : f32 to vector<264x1xf32>
    %10 = arith.mulf %6, %9 : vector<264x1xf32>
    %11 = arith.mulf %8, %8 : vector<264x1xf32>
    %12 = arith.subf %10, %11 : vector<264x1xf32>
    %cst_8 = arith.constant 0.000000e+00 : f32
    %13 = vector.broadcast %cst_8 : f32 to vector<264x1xf32>
    %14 = arith.maximumf %12, %13 : vector<264x1xf32>
    %c0_9 = arith.constant 0 : index
    %c0_10 = arith.constant 0 : index
    %15 = vector.load %arg3[%c0_9, %c0_10] : memref<264x2xf32, #tpu.memory_space<vmem>>, vector<264x1xf32>
    %c0_11 = arith.constant 0 : index
    %c1 = arith.constant 1 : index
    %16 = vector.load %arg3[%c0_11, %c1] : memref<264x2xf32, #tpu.memory_space<vmem>>, vector<264x1xf32>
    %cst_12 = arith.constant 9.99999974E-6 : f32
    %17 = vector.broadcast %cst_12 : f32 to vector<264x1xf32>
    %18 = arith.addf %14, %17 : vector<264x1xf32>
    %19 = math.rsqrt %18 : vector<264x1xf32>
    %20 = arith.mulf %15, %19 : vector<264x1xf32>
    %21 = arith.mulf %8, %20 : vector<264x1xf32>
    %22 = arith.subf %16, %21 : vector<264x1xf32>
    %23 = vector.broadcast %20 : vector<264x1xf32> to vector<264x196xf32>
    %24 = arith.mulf %2, %23 : vector<264x196xf32>
    %25 = vector.broadcast %22 : vector<264x1xf32> to vector<264x196xf32>
    %26 = arith.addf %24, %25 : vector<264x196xf32>
    %c0_13 = arith.constant 0 : index
    %c0_14 = arith.constant 0 : index
    %27 = vector.load %arg4[%c0_13, %c0_14] : memref<264x196xf32, #tpu.memory_space<vmem>>, vector<264x196xf32>
    tpu.vector_store %arg4[%c0_13, %c0_14], %26 {strides = array<i32>} : memref<264x196xf32, #tpu.memory_space<vmem>>, vector<264x196xf32>,
    return
  }
  func.func @transform_0(%arg0: i32) -> (i32, i32) {
    %c0_i32 = arith.constant 0 : i32
    %c0_i32_0 = arith.constant 0 : i32
    %c0_i32_1 = arith.constant 0 : i32
    return %c0_i32, %c0_i32_0 : i32, i32
  }
  func.func @transform_1(%arg0: i32) -> (i32, i32) {
    %c0_i32 = arith.constant 0 : i32
    %c0_i32_0 = arith.constant 0 : i32
    return %arg0, %c0_i32 : i32, i32
  }
  func.func @transform_2(%arg0: i32) -> (i32, i32) {
    %c0_i32 = arith.constant 0 : i32
    %c0_i32_0 = arith.constant 0 : i32
    return %arg0, %c0_i32 : i32, i32
  }
  func.func @transform_3(%arg0: i32) -> (i32, i32) {
    %c0_i32 = arith.constant 0 : i32
    %c0_i32_0 = arith.constant 0 : i32
    return %arg0, %c0_i32 : i32, i32
  }
}

</mosaic_0001>

<llo_original>
// kernel: tpu_custom_call.1
$region0: #{tpu_custom_call.1}
  #allocation0 [shape = 'u32[]', space=smem, size = 0x4, offset = 0x4, fixed_abs, tag = 'smem constant byte address 0x4 - core index']
  #allocation1 [shape = 'u32[72,128]{1,0:T(1,128)}', space=vmem, size = 0x9000, scoped, tag = 'internal scratch']
  %s0 = inlined_call_operand.vmem [shape: f32[176,196], index: 0, kind: input, shape index: {}]
  %s1 = inlined_call_operand.vmem [shape: f32[1056,176], index: 1, kind: input, shape index: {}]
  %s2 = inlined_call_operand.vmem [shape: f32[1056,2], index: 2, kind: input, shape index: {}]
  %s3 = inlined_call_operand.vmem [shape: f32[1056,196], index: 3, kind: output, shape index: {}]
  %s4 = sld [smem:[#allocation0]]
  $region45: #{tpu_custom_call.1} parent=0
    _
  %s6 = ssub.s32 1, %s4
  %s7 = scalar_select 0, %s6, %s4
  loop: start=0, step=1, limit=6
  $region2: #{tpu_custom_call.1} parent=0 // loop_pre_header
    _
  $region3: #{tpu_custom_call.1} parent=0 // loop_header
    %s9 = sphi 0, %s13
    %p10 = scmp.ge.s32.totalorder %s9, 6
    %s17 = sphi 0, %s17
    %s19 = sphi 0, %s17
    %s20 = sphi 0, %s19
    %s34 = sphi 0, %s20
    %s40 = sphi 0, %s42
    %s43 = sphi 0, %s40
    %s44 = sphi 0, %s43
    %s60 = sphi 0, %s44
    %s66 = sphi 0, %s68
    %s69 = sphi 0, %s66
    %s70 = sphi 0, %s69
    %s86 = sphi 0, %s70
    %s92 = sphi 0, %s94
    %s95 = sphi 0, %s92
    %s96 = sphi 0, %s95
    %s112 = sphi 0, %s96
  $region4: #{tpu_custom_call.1} parent=0 // loop_header_branch
    %12 = sbr.rel (%p10) target = $region8
  $region5: #{tpu_custom_call.1} parent=0 // loop_body
    %s14 = ssub.s32 %s9, 1
    %s15 = ssub.s32 %s9, 2
    %s16 = sadd.s32 %s9, 1
    %s18 = sadd.s32 %s17, 1
    %p21 = scmp.eq.s32.totalorder %s9, 3
    %p22 = scmp.ne.s32.totalorder %s17, %s19
    %p23 = scmp.eq.s32.totalorder %s9, 0
    %p24 = por %p22, %p23
    %p25 = scmp.ne.s32.totalorder %s17, %s19
    %p26 = scmp.eq.s32.totalorder %s14, 3
    %p27 = por %p25, %p26
    %p28 = scmp.ne.s32.totalorder %s19, %s20
    %p29 = scmp.eq.s32.totalorder %s14, 0
    %p30 = por %p28, %p29
    %p31 = scmp.ne.s32.totalorder %s19, %s20
    %p32 = scmp.eq.s32.totalorder %s15, 3
    %p33 = por %p31, %p32
    %p35 = scmp.ne.s32.totalorder %s20, %s34
    %p36 = scmp.eq.s32.totalorder %s15, 0
    %p37 = por %p35, %p36
    %s38 = ssub.s32 %s9, %s16
    %p39 = scmp.eq.s32.totalorder %s38, 0
    %s41 = sadd.s32 %s40, 1
    %s42 = scalar_select %p39, %s40, %s41
    %p45 = pneg %p39
    %p46 = scmp.eq.s32.totalorder %s9, 3
    %p47 = por %p45, %p46
    %p48 = scmp.ne.s32.totalorder %s40, %s43
    %p49 = scmp.eq.s32.totalorder %s9, 0
    %p50 = por %p48, %p49
    %p51 = scmp.ne.s32.totalorder %s40, %s43
    %p52 = scmp.eq.s32.totalorder %s14, 3
    %p53 = por %p51, %p52
    %p54 = scmp.ne.s32.totalorder %s43, %s44
    %p55 = scmp.eq.s32.totalorder %s14, 0
    %p56 = por %p54, %p55
    %p57 = scmp.ne.s32.totalorder %s43, %s44
    %p58 = scmp.eq.s32.totalorder %s15, 3
    %p59 = por %p57, %p58
    %p61 = scmp.ne.s32.totalorder %s44, %s60
    %p62 = scmp.eq.s32.totalorder %s15, 0
    %p63 = por %p61, %p62
    %s64 = ssub.s32 %s9, %s16
    %p65 = scmp.eq.s32.totalorder %s64, 0
    %s67 = sadd.s32 %s66, 1
    %s68 = scalar_select %p65, %s66, %s67
    %p71 = pneg %p65
    %p72 = scmp.eq.s32.totalorder %s9, 3
    %p73 = por %p71, %p72
    %p74 = scmp.ne.s32.totalorder %s66, %s69
    %p75 = scmp.eq.s32.totalorder %s9, 0
    %p76 = por %p74, %p75
    %p77 = scmp.ne.s32.totalorder %s66, %s69
    %p78 = scmp.eq.s32.totalorder %s14, 3
    %p79 = por %p77, %p78
    %p80 = scmp.ne.s32.totalorder %s69, %s70
    %p81 = scmp.eq.s32.totalorder %s14, 0
    %p82 = por %p80, %p81
    %p83 = scmp.ne.s32.totalorder %s69, %s70
    %p84 = scmp.eq.s32.totalorder %s15, 3
    %p85 = por %p83, %p84
    %p87 = scmp.ne.s32.totalorder %s70, %s86
    %p88 = scmp.eq.s32.totalorder %s15, 0
    %p89 = por %p87, %p88
    %s90 = ssub.s32 %s9, %s16
    %p91 = scmp.eq.s32.totalorder %s90, 0
    %s93 = sadd.s32 %s92, 1
    %s94 = scalar_select %p91, %s92, %s93
    %p97 = pneg %p91
    %p98 = scmp.eq.s32.totalorder %s9, 3
    %p99 = por %p97, %p98
    %p100 = scmp.ne.s32.totalorder %s92, %s95
    %p101 = scmp.eq.s32.totalorder %s9, 0
    %p102 = por %p100, %p101
    %p103 = scmp.ne.s32.totalorder %s92, %s95
    %p104 = scmp.eq.s32.totalorder %s14, 3
    %p105 = por %p103, %p104
    %p106 = scmp.ne.s32.totalorder %s95, %s96
    %p107 = scmp.eq.s32.totalorder %s14, 0
    %p108 = por %p106, %p107
    %p109 = scmp.ne.s32.totalorder %s95, %s96
    %p110 = scmp.eq.s32.totalorder %s15, 3
    %p111 = por %p109, %p110
    %p113 = scmp.ne.s32.totalorder %s96, %s112
    %p114 = scmp.eq.s32.totalorder %s15, 0
    %p115 = por %p113, %p114
    %p116 = scmp.le.s32.totalorder 1, %s9
    %p117 = scmp.lt.s32.totalorder %s9, 5
    %p118 = pnand %p116, %p117
    %p119 = pneg %p118
    // Predicated region
    $region9: #{tpu_custom_call.1} parent=5 // pred_check
      _
    $region10: #{tpu_custom_call.1} parent=5 // pred_check_branch
      %121 = sbr.rel (%p118) target = $region12
    $region11: #{tpu_custom_call.1} parent=5 // pred_region
      %s122 = ssub.s32 %s9, 1
      // Predicated region
      $region13: #{tpu_custom_call.1} parent=11 // pred_check
        %p123 = pneg %p30
      $region14: #{tpu_custom_call.1} parent=11 // pred_check_branch
        %125 = sbr.rel (%p123) target = $region16
      $region15: #{tpu_custom_call.1} parent=11 // pred_region
        _
      $region16: #{tpu_custom_call.1} parent=11 // pred_fallthru
        _
    $region12: #{tpu_custom_call.1} parent=5 // pred_fallthru
      _
    %p126 = scmp.lt.s32.totalorder %s9, 4
    // Predicated region
    $region17: #{tpu_custom_call.1} parent=5 // pred_check
      %p127 = pneg %p126
    $region18: #{tpu_custom_call.1} parent=5 // pred_check_branch
      %129 = sbr.rel (%p127) target = $region20
    $region19: #{tpu_custom_call.1} parent=5 // pred_region
      // Predicated region
      $region21: #{tpu_custom_call.1} parent=19 // pred_check
        %p130 = pneg %p50
      $region22: #{tpu_custom_call.1} parent=19 // pred_check_branch
        %132 = sbr.rel (%p130) target = $region24
      $region23: #{tpu_custom_call.1} parent=19 // pred_region
        %s133 = smul.u32 33, %s9
        %p134 = scmp.lt.s32.totalorder %s133, 131
        %s135 = scalar_select %p134, %s133, 131
        %s136 = smul.addr %s135, 2
        %s137 = smul.addr %s136, 8
        %s138 = scalar_lea.vmem %s1, %s137
        %s139 = smul.u32 33, %s9
      $region24: #{tpu_custom_call.1} parent=19 // pred_fallthru
        _
      // Predicated region
      $region25: #{tpu_custom_call.1} parent=19 // pred_check
        %p140 = pneg %p76
      $region26: #{tpu_custom_call.1} parent=19 // pred_check_branch
        %142 = sbr.rel (%p140) target = $region28
      $region27: #{tpu_custom_call.1} parent=19 // pred_region
        %s143 = smul.u32 33, %s9
        %p144 = scmp.lt.s32.totalorder %s143, 131
        %s145 = scalar_select %p144, %s143, 131
        %s146 = smul.addr %s145, 8
        %s147 = scalar_lea.vmem %s2, %s146
        %s148 = smul.u32 33, %s9
      $region28: #{tpu_custom_call.1} parent=19 // pred_fallthru
        _
    $region20: #{tpu_custom_call.1} parent=5 // pred_fallthru
      _
    %p149 = scmp.le.s32.totalorder 1, %s9
    %p150 = scmp.lt.s32.totalorder %s9, 5
    %p151 = pnand %p149, %p150
    %p152 = pneg %p151
    // Predicated region
    $region29: #{tpu_custom_call.1} parent=5 // pred_check
      _
    $region30: #{tpu_custom_call.1} parent=5 // pred_check_branch
      %154 = sbr.rel (%p151) target = $region32
    $region31: #{tpu_custom_call.1} parent=5 // pred_region
      %s155 = ssub.s32 %s9, 1
      %p156 = pneg %p30
      %p157 = pneg %p27
      %s158 = smul.u32 33, %s14
      %p159 = scmp.lt.s32.totalorder %s158, 131
      %s160 = scalar_select %p159, %s158, 131
      %s161 = smul.addr %s160, 2
      %s162 = smul.addr %s161, 8
      %s163 = scalar_lea.vmem %s1, %s162
      %p164 = pneg %p56
      %p165 = pneg %p53
      %s166 = smul.u32 33, %s14
      %p167 = scmp.lt.s32.totalorder %s166, 131
      %s168 = scalar_select %p167, %s166, 131
      %s169 = smul.addr %s168, 8
      %s170 = scalar_lea.vmem %s2, %s169
      %p171 = pneg %p82
      %p172 = pneg %p79
      %p173 = pneg %p108
      %p174 = pneg %p105
      %s175 = smul.u32 33, %s14
      %p176 = scmp.lt.s32.totalorder %s175, 131
      %s177 = scalar_select %p176, %s175, 131
      %s178 = smul.addr %s177, 2
      %s179 = smul.addr %s178, 8
      %s180 = scalar_lea.vmem %s3, %s179
      %s181 = smul.u32 33, %s14
      %p182 = scmp.lt.s32.totalorder %s181, 131
      %s183 = scalar_select %p182, %s181, 131
      %s184 = smul.addr %s183, 2
      %s185 = smul.addr %s184, 8
      %s186 = scalar_lea.vmem %s1, %s185
      %s187 = smul.u32 33, %s14
      %s188 = smul.u32 33, %s14
      %p189 = scmp.lt.s32.totalorder %s188, 131
      %s190 = scalar_select %p189, %s188, 131
      %s191 = smul.addr %s190, 8
      %s192 = scalar_lea.vmem %s2, %s191
      %s193 = smul.u32 33, %s14
      %s194 = smul.u32 33, %s14
      %p195 = scmp.lt.s32.totalorder %s194, 131
      %s196 = scalar_select %p195, %s194, 131
      %s197 = smul.addr %s196, 2
      %s198 = smul.addr %s197, 8
      %s199 = scalar_lea.vmem %s3, %s198
      %s200 = smul.u32 33, %s14
      %v201 = vld [vmem:[%s0] sm:$0xff]
      %v202 = vld [vmem:[%s0 + $0x8] sm:$0xff]
      %v203 = vld [vmem:[%s0 + $0x10] sm:$0xff]
      %v204 = vld [vmem:[%s0 + $0x18] sm:$0xff]
      %v205 = vld [vmem:[%s0 + $0x20] sm:$0xff]
      %v206 = vld [vmem:[%s0 + $0x28] sm:$0xff]
      %v207 = vld [vmem:[%s0 + $0x30] sm:$0xff]
      %v208 = vld [vmem:[%s0 + $0x38] sm:$0xff]
      %v209 = vld [vmem:[%s0 + $0x40] sm:$0xff]
      %v210 = vld [vmem:[%s0 + $0x48] sm:$0xff]
      %v211 = vld [vmem:[%s0 + $0x50] sm:$0xff]
      %v212 = vld [vmem:[%s0 + $0x58] sm:$0xff]
      %v213 = vld [vmem:[%s0 + $0x60] sm:$0xff]
      %v214 = vld [vmem:[%s0 + $0x68] sm:$0xff]
      %v215 = vld [vmem:[%s0 + $0x70] sm:$0xff]
      %v216 = vld [vmem:[%s0 + $0x78] sm:$0xff]
      %v217 = vld [vmem:[%s0 + $0x80] sm:$0xff]
      %v218 = vld [vmem:[%s0 + $0x88] sm:$0xff]
      %v219 = vld [vmem:[%s0 + $0x90] sm:$0xff]
      %v220 = vld [vmem:[%s0 + $0x98] sm:$0xff]
      %v221 = vld [vmem:[%s0 + $0xa0] sm:$0xff]
      %v222 = vld [vmem:[%s0 + $0xa8] sm:$0xff]
      %v223 = vld [vmem:[%s0 + $0xb0] sm:$0xff]
      %v224 = vld [vmem:[%s0 + $0xb8] sm:$0xff]
      %v225 = vld [vmem:[%s0 + $0xc0] sm:$0xff]
      %v226 = vld [vmem:[%s0 + $0xc8] sm:$0xff]
      %v227 = vld [vmem:[%s0 + $0xd0] sm:$0xff]
      %v228 = vld [vmem:[%s0 + $0xd8] sm:$0xff]
      %v229 = vld [vmem:[%s0 + $0xe0] sm:$0xff]
      %v230 = vld [vmem:[%s0 + $0xe8] sm:$0xff]
      %v231 = vld [vmem:[%s0 + $0xf0] sm:$0xff]
      %v232 = vld [vmem:[%s0 + $0xf8] sm:$0xff]
      %v233 = vld [vmem:[%s0 + $0x100] sm:$0xff]
      %v234 = vld [vmem:[%s0 + $0x108] sm:$0xff]
      %v235 = vld [vmem:[%s0 + $0x110] sm:$0xff]
      %v236 = vld [vmem:[%s0 + $0x118] sm:$0xff]
      %v237 = vld [vmem:[%s0 + $0x120] sm:$0xff]
      %v238 = vld [vmem:[%s0 + $0x128] sm:$0xff]
      %v239 = vld [vmem:[%s0 + $0x130] sm:$0xff]
      %v240 = vld [vmem:[%s0 + $0x138] sm:$0xff]
      %v241 = vld [vmem:[%s0 + $0x140] sm:$0xff]
      %v242 = vld [vmem:[%s0 + $0x148] sm:$0xff]
      %v243 = vld [vmem:[%s0 + $0x150] sm:$0xff]
      %v244 = vld [vmem:[%s0 + $0x158] sm:$0xff]
      %v245 = vld [vmem:[%s186] sm:$0xff]
      %v246 = vld [vmem:[%s186 + $0x8] sm:$0xff]
      %v247 = vld [vmem:[%s186 + $0x10] sm:$0xff]
      %v248 = vld [vmem:[%s186 + $0x18] sm:$0xff]
      %v249 = vld [vmem:[%s186 + $0x20] sm:$0xff]
      %v250 = vld [vmem:[%s186 + $0x28] sm:$0xff]
      %v251 = vld [vmem:[%s186 + $0x30] sm:$0xff]
      %v252 = vld [vmem:[%s186 + $0x38] sm:$0xff]
      %v253 = vld [vmem:[%s186 + $0x40] sm:$0xff]
      %v254 = vld [vmem:[%s186 + $0x48] sm:$0xff]
      %v255 = vld [vmem:[%s186 + $0x50] sm:$0xff]
      %v256 = vld [vmem:[%s186 + $0x58] sm:$0xff]
      %v257 = vld [vmem:[%s186 + $0x60] sm:$0xff]
      %v258 = vld [vmem:[%s186 + $0x68] sm:$0xff]
      %v259 = vld [vmem:[%s186 + $0x70] sm:$0xff]
      %v260 = vld [vmem:[%s186 + $0x78] sm:$0xff]
      %v261 = vld [vmem:[%s186 + $0x80] sm:$0xff]
      %v262 = vld [vmem:[%s186 + $0x88] sm:$0xff]
      %v263 = vld [vmem:[%s186 + $0x90] sm:$0xff]
      %v264 = vld [vmem:[%s186 + $0x98] sm:$0xff]
      %v265 = vld [vmem:[%s186 + $0xa0] sm:$0xff]
      %v266 = vld [vmem:[%s186 + $0xa8] sm:$0xff]
      %v267 = vld [vmem:[%s186 + $0xb0] sm:$0xff]
      %v268 = vld [vmem:[%s186 + $0xb8] sm:$0xff]
      %v269 = vld [vmem:[%s186 + $0xc0] sm:$0xff]
      %v270 = vld [vmem:[%s186 + $0xc8] sm:$0xff]
      %v271 = vld [vmem:[%s186 + $0xd0] sm:$0xff]
      %v272 = vld [vmem:[%s186 + $0xd8] sm:$0xff]
      %v273 = vld [vmem:[%s186 + $0xe0] sm:$0xff]
      %v274 = vld [vmem:[%s186 + $0xe8] sm:$0xff]
      %v275 = vld [vmem:[%s186 + $0xf0] sm:$0xff]
      %v276 = vld [vmem:[%s186 + $0xf8] sm:$0xff]
      %v277 = vld [vmem:[%s186 + $0x100] sm:$0xff]
      %v278 = vld [vmem:[%s186 + $0x108] sm:$0xff]
      %v279 = vld [vmem:[%s186 + $0x110] sm:$0xff]
      %v280 = vld [vmem:[%s186 + $0x118] sm:$0xff]
      %v281 = vld [vmem:[%s186 + $0x120] sm:$0xff]
      %v282 = vld [vmem:[%s186 + $0x128] sm:$0xff]
      %v283 = vld [vmem:[%s186 + $0x130] sm:$0xff]
      %v284 = vld [vmem:[%s186 + $0x138] sm:$0xff]
      %v285 = vld [vmem:[%s186 + $0x140] sm:$0xff]
      %v286 = vld [vmem:[%s186 + $0x148] sm:$0xff]
      %v287 = vld [vmem:[%s186 + $0x150] sm:$0xff]
      %v288 = vld [vmem:[%s186 + $0x158] sm:$0xff]
      %v289 = vld [vmem:[%s186 + $0x160] sm:$0xff]
      %v290 = vld [vmem:[%s186 + $0x168] sm:$0xff]
      %v291 = vld [vmem:[%s186 + $0x170] sm:$0xff]
      %v292 = vld [vmem:[%s186 + $0x178] sm:$0xff]
      %v293 = vld [vmem:[%s186 + $0x180] sm:$0xff]
      %v294 = vld [vmem:[%s186 + $0x188] sm:$0xff]
      %v295 = vld [vmem:[%s186 + $0x190] sm:$0xff]
      %v296 = vld [vmem:[%s186 + $0x198] sm:$0xff]
      %v297 = vld [vmem:[%s186 + $0x1a0] sm:$0xff]
      %v298 = vld [vmem:[%s186 + $0x1a8] sm:$0xff]
      %v299 = vld [vmem:[%s186 + $0x1b0] sm:$0xff]
      %v300 = vld [vmem:[%s186 + $0x1b8] sm:$0xff]
      %v301 = vld [vmem:[%s186 + $0x1c0] sm:$0xff]
      %v302 = vld [vmem:[%s186 + $0x1c8] sm:$0xff]
      %v303 = vld [vmem:[%s186 + $0x1d0] sm:$0xff]
      %v304 = vld [vmem:[%s186 + $0x1d8] sm:$0xff]
      %v305 = vld [vmem:[%s186 + $0x1e0] sm:$0xff]
      %v306 = vld [vmem:[%s186 + $0x1e8] sm:$0xff]
      %v307 = vld [vmem:[%s186 + $0x1f0] sm:$0xff]
      %v308 = vld [vmem:[%s186 + $0x1f8] sm:$0xff]
      %v309 = vld [vmem:[%s186 + $0x200] sm:$0xff]
      %v310 = vld [vmem:[%s186 + $0x208] sm:$0xff]
      %vm311 = vcmask 392192
      %v313 = vsel %vm311, %v246, 0
      %v316 = vsel %vm311, %v248, 0
      %v319 = vsel %vm311, %v250, 0
      %v322 = vsel %vm311, %v252, 0
      %v325 = vsel %vm311, %v254, 0
      %v328 = vsel %vm311, %v256, 0
      %v331 = vsel %vm311, %v258, 0
      %v334 = vsel %vm311, %v260, 0
      %v337 = vsel %vm311, %v262, 0
      %v340 = vsel %vm311, %v264, 0
      %v343 = vsel %vm311, %v266, 0
      %v346 = vsel %vm311, %v268, 0
      %v349 = vsel %vm311, %v270, 0
      %v352 = vsel %vm311, %v272, 0
      %v355 = vsel %vm311, %v274, 0
      %v358 = vsel %vm311, %v276, 0
      %v361 = vsel %vm311, %v278, 0
      %v364 = vsel %vm311, %v280, 0
      %v367 = vsel %vm311, %v282, 0
      %v370 = vsel %vm311, %v284, 0
      %v373 = vsel %vm311, %v286, 0
      %v376 = vsel %vm311, %v288, 0
      %v379 = vsel %vm311, %v290, 0
      %v382 = vsel %vm311, %v292, 0
      %v385 = vsel %vm311, %v294, 0
      %v388 = vsel %vm311, %v296, 0
      %v391 = vsel %vm311, %v298, 0
      %v394 = vsel %vm311, %v300, 0
      %v397 = vsel %vm311, %v302, 0
      %v400 = vsel %vm311, %v304, 0
      %v403 = vsel %vm311, %v306, 0
      %v406 = vsel %vm311, %v308, 0
      %v409 = vsel %vm311, %v310, 0
      %411 = vmatpush.msra.mxu0 %v231
      %412 = vmatpush.msra.mxu0 %v229
      %413 = vmatpush.msra.mxu0 %v227
      %414 = vmatpush.msra.mxu0 %v225
      %415 = vmatpush.msra.mxu0 %v223
      %416 = vmatpush.msra.mxu0 %v221
      %417 = vmatpush.msra.mxu0 %v219
      %418 = vmatpush.msra.mxu0 %v217
      %419 = vmatpush.msra.mxu0 %v215
      %420 = vmatpush.msra.mxu0 %v213
      %421 = vmatpush.msra.mxu0 %v211
      %422 = vmatpush.msra.mxu0 %v209
      %423 = vmatpush.msra.mxu0 %v207
      %424 = vmatpush.msra.mxu0 %v205
      %425 = vmatpush.msra.mxu0 %v203
      %426 = vmatpush.msra.mxu0 %v201
      %427 = vmatmul.f32.gmra.mxu0 %v245
      %v428 = vpop.f32.mrf.mxu0
      %v429 = vadd.f32 0.0, %v428
      %430 = vmatmul.f32.gmra.mxu0 %v247
      %v431 = vpop.f32.mrf.mxu0
      %v432 = vadd.f32 0.0, %v431
      %433 = vmatmul.f32.gmra.mxu0 %v249
      %v434 = vpop.f32.mrf.mxu0
      %v435 = vadd.f32 0.0, %v434
      %436 = vmatmul.f32.gmra.mxu0 %v251
      %v437 = vpop.f32.mrf.mxu0
      %v438 = vadd.f32 0.0, %v437
      %439 = vmatmul.f32.gmra.mxu0 %v253
      %v440 = vpop.f32.mrf.mxu0
      %v441 = vadd.f32 0.0, %v440
      %442 = vmatmul.f32.gmra.mxu0 %v255
      %v443 = vpop.f32.mrf.mxu0
      %v444 = vadd.f32 0.0, %v443
      %445 = vmatmul.f32.gmra.mxu0 %v257
      %v446 = vpop.f32.mrf.mxu0
      %v447 = vadd.f32 0.0, %v446
      %448 = vmatmul.f32.gmra.mxu0 %v259
      %v449 = vpop.f32.mrf.mxu0
      %v450 = vadd.f32 0.0, %v449
      %451 = vmatmul.f32.gmra.mxu0 %v261
      %v452 = vpop.f32.mrf.mxu0
      %v453 = vadd.f32 0.0, %v452
      %454 = vmatmul.f32.gmra.mxu0 %v263
      %v455 = vpop.f32.mrf.mxu0
      %v456 = vadd.f32 0.0, %v455
      %457 = vmatmul.f32.gmra.mxu0 %v265
      %v458 = vpop.f32.mrf.mxu0
      %v459 = vadd.f32 0.0, %v458
      %460 = vmatmul.f32.gmra.mxu0 %v267
      %v461 = vpop.f32.mrf.mxu0
      %v462 = vadd.f32 0.0, %v461
      %463 = vmatmul.f32.gmra.mxu0 %v269
      %v464 = vpop.f32.mrf.mxu0
      %v465 = vadd.f32 0.0, %v464
      %466 = vmatmul.f32.gmra.mxu0 %v271
      %v467 = vpop.f32.mrf.mxu0
      %v468 = vadd.f32 0.0, %v467
      %469 = vmatmul.f32.gmra.mxu0 %v273
      %v470 = vpop.f32.mrf.mxu0
      %v471 = vadd.f32 0.0, %v470
      %472 = vmatmul.f32.gmra.mxu0 %v275
      %v473 = vpop.f32.mrf.mxu0
      %v474 = vadd.f32 0.0, %v473
      %475 = vmatmul.f32.gmra.mxu0 %v277
      %v476 = vpop.f32.mrf.mxu0
      %v477 = vadd.f32 0.0, %v476
      %478 = vmatmul.f32.gmra.mxu0 %v279
      %v479 = vpop.f32.mrf.mxu0
      %v480 = vadd.f32 0.0, %v479
      %481 = vmatmul.f32.gmra.mxu0 %v281
      %v482 = vpop.f32.mrf.mxu0
      %v483 = vadd.f32 0.0, %v482
      %484 = vmatmul.f32.gmra.mxu0 %v283
      %v485 = vpop.f32.mrf.mxu0
      %v486 = vadd.f32 0.0, %v485
      %487 = vmatmul.f32.gmra.mxu0 %v285
      %v488 = vpop.f32.mrf.mxu0
      %v489 = vadd.f32 0.0, %v488
      %490 = vmatmul.f32.gmra.mxu0 %v287
      %v491 = vpop.f32.mrf.mxu0
      %v492 = vadd.f32 0.0, %v491
      %493 = vmatmul.f32.gmra.mxu0 %v289
      %v494 = vpop.f32.mrf.mxu0
      %v495 = vadd.f32 0.0, %v494
      %496 = vmatmul.f32.gmra.mxu0 %v291
      %v497 = vpop.f32.mrf.mxu0
      %v498 = vadd.f32 0.0, %v497
      %499 = vmatmul.f32.gmra.mxu0 %v293
      %v500 = vpop.f32.mrf.mxu0
      %v501 = vadd.f32 0.0, %v500
      %502 = vmatmul.f32.gmra.mxu0 %v295
      %v503 = vpop.f32.mrf.mxu0
      %v504 = vadd.f32 0.0, %v503
      %505 = vmatmul.f32.gmra.mxu0 %v297
      %v506 = vpop.f32.mrf.mxu0
      %v507 = vadd.f32 0.0, %v506
      %508 = vmatmul.f32.gmra.mxu0 %v299
      %v509 = vpop.f32.mrf.mxu0
      %v510 = vadd.f32 0.0, %v509
      %511 = vmatmul.f32.gmra.mxu0 %v301
      %v512 = vpop.f32.mrf.mxu0
      %v513 = vadd.f32 0.0, %v512
      %514 = vmatmul.f32.gmra.mxu0 %v303
      %v515 = vpop.f32.mrf.mxu0
      %v516 = vadd.f32 0.0, %v515
      %517 = vmatmul.f32.gmra.mxu0 %v305
      %v518 = vpop.f32.mrf.mxu0
      %v519 = vadd.f32 0.0, %v518
      %520 = vmatmul.f32.gmra.mxu0 %v307
      %v521 = vpop.f32.mrf.mxu0
      %v522 = vadd.f32 0.0, %v521
      %523 = vmatmul.f32.gmra.mxu0 %v309
      %v524 = vpop.f32.mrf.mxu0
      %v525 = vadd.f32 0.0, %v524
      %526 = vdwg.mxu0
      %527 = vmatpush.msra.mxu0 0.0
      %528 = vmatpush.msra.mxu0 0.0
      %529 = vmatpush.msra.mxu0 0.0
      %530 = vmatpush.msra.mxu0 0.0
      %531 = vmatpush.msra.mxu0 0.0
      %532 = vmatpush.msra.mxu0 0.0
      %533 = vmatpush.msra.mxu0 0.0
      %534 = vmatpush.msra.mxu0 0.0
      %535 = vmatpush.msra.mxu0 0.0
      %536 = vmatpush.msra.mxu0 0.0
      %537 = vmatpush.msra.mxu0 %v243
      %538 = vmatpush.msra.mxu0 %v241
      %539 = vmatpush.msra.mxu0 %v239
      %540 = vmatpush.msra.mxu0 %v237
      %541 = vmatpush.msra.mxu0 %v235
      %542 = vmatpush.msra.mxu0 %v233
      %543 = vmatmul.f32.gmra.mxu0 %v313
      %v544 = vpop.f32.mrf.mxu0
      %v545 = vadd.f32 %v429, %v544
      %546 = vmatmul.f32.gmra.mxu0 %v316
      %v547 = vpop.f32.mrf.mxu0
      %v548 = vadd.f32 %v432, %v547
      %549 = vmatmul.f32.gmra.mxu0 %v319
      %v550 = vpop.f32.mrf.mxu0
      %v551 = vadd.f32 %v435, %v550
      %552 = vmatmul.f32.gmra.mxu0 %v322
      %v553 = vpop.f32.mrf.mxu0
      %v554 = vadd.f32 %v438, %v553
      %555 = vmatmul.f32.gmra.mxu0 %v325
      %v556 = vpop.f32.mrf.mxu0
      %v557 = vadd.f32 %v441, %v556
      %558 = vmatmul.f32.gmra.mxu0 %v328
      %v559 = vpop.f32.mrf.mxu0
      %v560 = vadd.f32 %v444, %v559
      %561 = vmatmul.f32.gmra.mxu0 %v331
      %v562 = vpop.f32.mrf.mxu0
      %v563 = vadd.f32 %v447, %v562
      %564 = vmatmul.f32.gmra.mxu0 %v334
      %v565 = vpop.f32.mrf.mxu0
      %v566 = vadd.f32 %v450, %v565
      %567 = vmatmul.f32.gmra.mxu0 %v337
      %v568 = vpop.f32.mrf.mxu0
      %v569 = vadd.f32 %v453, %v568
      %570 = vmatmul.f32.gmra.mxu0 %v340
      %v571 = vpop.f32.mrf.mxu0
      %v572 = vadd.f32 %v456, %v571
      %573 = vmatmul.f32.gmra.mxu0 %v343
      %v574 = vpop.f32.mrf.mxu0
      %v575 = vadd.f32 %v459, %v574
      %576 = vmatmul.f32.gmra.mxu0 %v346
      %v577 = vpop.f32.mrf.mxu0
      %v578 = vadd.f32 %v462, %v577
      %579 = vmatmul.f32.gmra.mxu0 %v349
      %v580 = vpop.f32.mrf.mxu0
      %v581 = vadd.f32 %v465, %v580
      %582 = vmatmul.f32.gmra.mxu0 %v352
      %v583 = vpop.f32.mrf.mxu0
      %v584 = vadd.f32 %v468, %v583
      %585 = vmatmul.f32.gmra.mxu0 %v355
      %v586 = vpop.f32.mrf.mxu0
      %v587 = vadd.f32 %v471, %v586
      %588 = vmatmul.f32.gmra.mxu0 %v358
      %v589 = vpop.f32.mrf.mxu0
      %v590 = vadd.f32 %v474, %v589
      %591 = vmatmul.f32.gmra.mxu0 %v361
      %v592 = vpop.f32.mrf.mxu0
      %v593 = vadd.f32 %v477, %v592
      %594 = vmatmul.f32.gmra.mxu0 %v364
      %v595 = vpop.f32.mrf.mxu0
      %v596 = vadd.f32 %v480, %v595
      %597 = vmatmul.f32.gmra.mxu0 %v367
      %v598 = vpop.f32.mrf.mxu0
      %v599 = vadd.f32 %v483, %v598
      %600 = vmatmul.f32.gmra.mxu0 %v370
      %v601 = vpop.f32.mrf.mxu0
      %v602 = vadd.f32 %v486, %v601
      %603 = vmatmul.f32.gmra.mxu0 %v373
      %v604 = vpop.f32.mrf.mxu0
      %v605 = vadd.f32 %v489, %v604
      %606 = vmatmul.f32.gmra.mxu0 %v376
      %v607 = vpop.f32.mrf.mxu0
      %v608 = vadd.f32 %v492, %v607
      %609 = vmatmul.f32.gmra.mxu0 %v379
      %v610 = vpop.f32.mrf.mxu0
      %v611 = vadd.f32 %v495, %v610
      %612 = vmatmul.f32.gmra.mxu0 %v382
      %v613 = vpop.f32.mrf.mxu0
      %v614 = vadd.f32 %v498, %v613
      %615 = vmatmul.f32.gmra.mxu0 %v385
      %v616 = vpop.f32.mrf.mxu0
      %v617 = vadd.f32 %v501, %v616
      %618 = vmatmul.f32.gmra.mxu0 %v388
      %v619 = vpop.f32.mrf.mxu0
      %v620 = vadd.f32 %v504, %v619
      %621 = vmatmul.f32.gmra.mxu0 %v391
      %v622 = vpop.f32.mrf.mxu0
      %v623 = vadd.f32 %v507, %v622
      %624 = vmatmul.f32.gmra.mxu0 %v394
      %v625 = vpop.f32.mrf.mxu0
      %v626 = vadd.f32 %v510, %v625
      %627 = vmatmul.f32.gmra.mxu0 %v397
      %v628 = vpop.f32.mrf.mxu0
      %v629 = vadd.f32 %v513, %v628
      %630 = vmatmul.f32.gmra.mxu0 %v400
      %v631 = vpop.f32.mrf.mxu0
      %v632 = vadd.f32 %v516, %v631
      %633 = vmatmul.f32.gmra.mxu0 %v403
      %v634 = vpop.f32.mrf.mxu0
      %v635 = vadd.f32 %v519, %v634
      %636 = vmatmul.f32.gmra.mxu0 %v406
      %v637 = vpop.f32.mrf.mxu0
      %v638 = vadd.f32 %v522, %v637
      %639 = vmatmul.f32.gmra.mxu0 %v409
      %v640 = vpop.f32.mrf.mxu0
      %v641 = vadd.f32 %v525, %v640
      %642 = vdwg.mxu0
      %643 = vmatpush.msra.mxu0 %v232
      %644 = vmatpush.msra.mxu0 %v230
      %645 = vmatpush.msra.mxu0 %v228
      %646 = vmatpush.msra.mxu0 %v226
      %647 = vmatpush.msra.mxu0 %v224
      %648 = vmatpush.msra.mxu0 %v222
      %649 = vmatpush.msra.mxu0 %v220
      %650 = vmatpush.msra.mxu0 %v218
      %651 = vmatpush.msra.mxu0 %v216
      %652 = vmatpush.msra.mxu0 %v214
      %653 = vmatpush.msra.mxu0 %v212
      %654 = vmatpush.msra.mxu0 %v210
      %655 = vmatpush.msra.mxu0 %v208
      %656 = vmatpush.msra.mxu0 %v206
      %657 = vmatpush.msra.mxu0 %v204
      %658 = vmatpush.msra.mxu0 %v202
      %659 = vmatmul.f32.gmra.mxu0 %v245
      %v660 = vpop.f32.mrf.mxu0
      %v661 = vadd.f32 0.0, %v660
      %662 = vmatmul.f32.gmra.mxu0 %v247
      %v663 = vpop.f32.mrf.mxu0
      %v664 = vadd.f32 0.0, %v663
      %665 = vmatmul.f32.gmra.mxu0 %v249
      %v666 = vpop.f32.mrf.mxu0
      %v667 = vadd.f32 0.0, %v666
      %668 = vmatmul.f32.gmra.mxu0 %v251
      %v669 = vpop.f32.mrf.mxu0
      %v670 = vadd.f32 0.0, %v669
      %671 = vmatmul.f32.gmra.mxu0 %v253
      %v672 = vpop.f32.mrf.mxu0
      %v673 = vadd.f32 0.0, %v672
      %674 = vmatmul.f32.gmra.mxu0 %v255
      %v675 = vpop.f32.mrf.mxu0
      %v676 = vadd.f32 0.0, %v675
      %677 = vmatmul.f32.gmra.mxu0 %v257
      %v678 = vpop.f32.mrf.mxu0
      %v679 = vadd.f32 0.0, %v678
      %680 = vmatmul.f32.gmra.mxu0 %v259
      %v681 = vpop.f32.mrf.mxu0
      %v682 = vadd.f32 0.0, %v681
      %683 = vmatmul.f32.gmra.mxu0 %v261
      %v684 = vpop.f32.mrf.mxu0
      %v685 = vadd.f32 0.0, %v684
      %686 = vmatmul.f32.gmra.mxu0 %v263
      %v687 = vpop.f32.mrf.mxu0
      %v688 = vadd.f32 0.0, %v687
      %689 = vmatmul.f32.gmra.mxu0 %v265
      %v690 = vpop.f32.mrf.mxu0
      %v691 = vadd.f32 0.0, %v690
      %692 = vmatmul.f32.gmra.mxu0 %v267
      %v693 = vpop.f32.mrf.mxu0
      %v694 = vadd.f32 0.0, %v693
      %695 = vmatmul.f32.gmra.mxu0 %v269
      %v696 = vpop.f32.mrf.mxu0
      %v697 = vadd.f32 0.0, %v696
      %698 = vmatmul.f32.gmra.mxu0 %v271
      %v699 = vpop.f32.mrf.mxu0
      %v700 = vadd.f32 0.0, %v699
      %701 = vmatmul.f32.gmra.mxu0 %v273
      %v702 = vpop.f32.mrf.mxu0
      %v703 = vadd.f32 0.0, %v702
      %704 = vmatmul.f32.gmra.mxu0 %v275
      %v705 = vpop.f32.mrf.mxu0
      %v706 = vadd.f32 0.0, %v705
      %707 = vmatmul.f32.gmra.mxu0 %v277
      %v708 = vpop.f32.mrf.mxu0
      %v709 = vadd.f32 0.0, %v708
      %710 = vmatmul.f32.gmra.mxu0 %v279
      %v711 = vpop.f32.mrf.mxu0
      %v712 = vadd.f32 0.0, %v711
      %713 = vmatmul.f32.gmra.mxu0 %v281
      %v714 = vpop.f32.mrf.mxu0
      %v715 = vadd.f32 0.0, %v714
      %716 = vmatmul.f32.gmra.mxu0 %v283
      %v717 = vpop.f32.mrf.mxu0
      %v718 = vadd.f32 0.0, %v717
      %719 = vmatmul.f32.gmra.mxu0 %v285
      %v720 = vpop.f32.mrf.mxu0
      %v721 = vadd.f32 0.0, %v720
      %722 = vmatmul.f32.gmra.mxu0 %v287
      %v723 = vpop.f32.mrf.mxu0
      %v724 = vadd.f32 0.0, %v723
      %725 = vmatmul.f32.gmra.mxu0 %v289
      %v726 = vpop.f32.mrf.mxu0
      %v727 = vadd.f32 0.0, %v726
      %728 = vmatmul.f32.gmra.mxu0 %v291
      %v729 = vpop.f32.mrf.mxu0
      %v730 = vadd.f32 0.0, %v729
      %731 = vmatmul.f32.gmra.mxu0 %v293
      %v732 = vpop.f32.mrf.mxu0
      %v733 = vadd.f32 0.0, %v732
      %734 = vmatmul.f32.gmra.mxu0 %v295
      %v735 = vpop.f32.mrf.mxu0
      %v736 = vadd.f32 0.0, %v735
      %737 = vmatmul.f32.gmra.mxu0 %v297
      %v738 = vpop.f32.mrf.mxu0
      %v739 = vadd.f32 0.0, %v738
      %740 = vmatmul.f32.gmra.mxu0 %v299
      %v741 = vpop.f32.mrf.mxu0
      %v742 = vadd.f32 0.0, %v741
      %743 = vmatmul.f32.gmra.mxu0 %v301
      %v744 = vpop.f32.mrf.mxu0
      %v745 = vadd.f32 0.0, %v744
      %746 = vmatmul.f32.gmra.mxu0 %v303
      %v747 = vpop.f32.mrf.mxu0
      %v748 = vadd.f32 0.0, %v747
      %749 = vmatmul.f32.gmra.mxu0 %v305
      %v750 = vpop.f32.mrf.mxu0
      %v751 = vadd.f32 0.0, %v750
      %752 = vmatmul.f32.gmra.mxu0 %v307
      %v753 = vpop.f32.mrf.mxu0
      %v754 = vadd.f32 0.0, %v753
      %755 = vmatmul.f32.gmra.mxu0 %v309
      %v756 = vpop.f32.mrf.mxu0
      %v757 = vadd.f32 0.0, %v756
      %758 = vdwg.mxu0
      %759 = vmatpush.msra.mxu0 0.0
      %760 = vmatpush.msra.mxu0 0.0
      %761 = vmatpush.msra.mxu0 0.0
      %762 = vmatpush.msra.mxu0 0.0
      %763 = vmatpush.msra.mxu0 0.0
      %764 = vmatpush.msra.mxu0 0.0
      %765 = vmatpush.msra.mxu0 0.0
      %766 = vmatpush.msra.mxu0 0.0
      %767 = vmatpush.msra.mxu0 0.0
      %768 = vmatpush.msra.mxu0 0.0
      %769 = vmatpush.msra.mxu0 %v244
      %770 = vmatpush.msra.mxu0 %v242
      %771 = vmatpush.msra.mxu0 %v240
      %772 = vmatpush.msra.mxu0 %v238
      %773 = vmatpush.msra.mxu0 %v236
      %774 = vmatpush.msra.mxu0 %v234
      %775 = vmatmul.f32.gmra.mxu0 %v313
      %v776 = vpop.f32.mrf.mxu0
      %v777 = vadd.f32 %v661, %v776
      %778 = vmatmul.f32.gmra.mxu0 %v316
      %v779 = vpop.f32.mrf.mxu0
      %v780 = vadd.f32 %v664, %v779
      %781 = vmatmul.f32.gmra.mxu0 %v319
      %v782 = vpop.f32.mrf.mxu0
      %v783 = vadd.f32 %v667, %v782
      %784 = vmatmul.f32.gmra.mxu0 %v322
      %v785 = vpop.f32.mrf.mxu0
      %v786 = vadd.f32 %v670, %v785
      %787 = vmatmul.f32.gmra.mxu0 %v325
      %v788 = vpop.f32.mrf.mxu0
      %v789 = vadd.f32 %v673, %v788
      %790 = vmatmul.f32.gmra.mxu0 %v328
      %v791 = vpop.f32.mrf.mxu0
      %v792 = vadd.f32 %v676, %v791
      %793 = vmatmul.f32.gmra.mxu0 %v331
      %v794 = vpop.f32.mrf.mxu0
      %v795 = vadd.f32 %v679, %v794
      %796 = vmatmul.f32.gmra.mxu0 %v334
      %v797 = vpop.f32.mrf.mxu0
      %v798 = vadd.f32 %v682, %v797
      %799 = vmatmul.f32.gmra.mxu0 %v337
      %v800 = vpop.f32.mrf.mxu0
      %v801 = vadd.f32 %v685, %v800
      %802 = vmatmul.f32.gmra.mxu0 %v340
      %v803 = vpop.f32.mrf.mxu0
      %v804 = vadd.f32 %v688, %v803
      %805 = vmatmul.f32.gmra.mxu0 %v343
      %v806 = vpop.f32.mrf.mxu0
      %v807 = vadd.f32 %v691, %v806
      %808 = vmatmul.f32.gmra.mxu0 %v346
      %v809 = vpop.f32.mrf.mxu0
      %v810 = vadd.f32 %v694, %v809
      %811 = vmatmul.f32.gmra.mxu0 %v349
      %v812 = vpop.f32.mrf.mxu0
      %v813 = vadd.f32 %v697, %v812
      %814 = vmatmul.f32.gmra.mxu0 %v352
      %v815 = vpop.f32.mrf.mxu0
      %v816 = vadd.f32 %v700, %v815
      %817 = vmatmul.f32.gmra.mxu0 %v355
      %v818 = vpop.f32.mrf.mxu0
      %v819 = vadd.f32 %v703, %v818
      %820 = vmatmul.f32.gmra.mxu0 %v358
      %v821 = vpop.f32.mrf.mxu0
      %v822 = vadd.f32 %v706, %v821
      %823 = vmatmul.f32.gmra.mxu0 %v361
      %v824 = vpop.f32.mrf.mxu0
      %v825 = vadd.f32 %v709, %v824
      %826 = vmatmul.f32.gmra.mxu0 %v364
      %v827 = vpop.f32.mrf.mxu0
      %v828 = vadd.f32 %v712, %v827
      %829 = vmatmul.f32.gmra.mxu0 %v367
      %v830 = vpop.f32.mrf.mxu0
      %v831 = vadd.f32 %v715, %v830
      %832 = vmatmul.f32.gmra.mxu0 %v370
      %v833 = vpop.f32.mrf.mxu0
      %v834 = vadd.f32 %v718, %v833
      %835 = vmatmul.f32.gmra.mxu0 %v373
      %v836 = vpop.f32.mrf.mxu0
      %v837 = vadd.f32 %v721, %v836
      %838 = vmatmul.f32.gmra.mxu0 %v376
      %v839 = vpop.f32.mrf.mxu0
      %v840 = vadd.f32 %v724, %v839
      %841 = vmatmul.f32.gmra.mxu0 %v379
      %v842 = vpop.f32.mrf.mxu0
      %v843 = vadd.f32 %v727, %v842
      %844 = vmatmul.f32.gmra.mxu0 %v382
      %v845 = vpop.f32.mrf.mxu0
      %v846 = vadd.f32 %v730, %v845
      %847 = vmatmul.f32.gmra.mxu0 %v385
      %v848 = vpop.f32.mrf.mxu0
      %v849 = vadd.f32 %v733, %v848
      %850 = vmatmul.f32.gmra.mxu0 %v388
      %v851 = vpop.f32.mrf.mxu0
      %v852 = vadd.f32 %v736, %v851
      %853 = vmatmul.f32.gmra.mxu0 %v391
      %v854 = vpop.f32.mrf.mxu0
      %v855 = vadd.f32 %v739, %v854
      %856 = vmatmul.f32.gmra.mxu0 %v394
      %v857 = vpop.f32.mrf.mxu0
      %v858 = vadd.f32 %v742, %v857
      %859 = vmatmul.f32.gmra.mxu0 %v397
      %v860 = vpop.f32.mrf.mxu0
      %v861 = vadd.f32 %v745, %v860
      %862 = vmatmul.f32.gmra.mxu0 %v400
      %v863 = vpop.f32.mrf.mxu0
      %v864 = vadd.f32 %v748, %v863
      %865 = vmatmul.f32.gmra.mxu0 %v403
      %v866 = vpop.f32.mrf.mxu0
      %v867 = vadd.f32 %v751, %v866
      %868 = vmatmul.f32.gmra.mxu0 %v406
      %v869 = vpop.f32.mrf.mxu0
      %v870 = vadd.f32 %v754, %v869
      %871 = vmatmul.f32.gmra.mxu0 %v409
      %v872 = vpop.f32.mrf.mxu0
      %v873 = vadd.f32 %v757, %v872
      %874 = vdwg.mxu0
      %vm875 = vcmask 556032
      %v877 = vsel %vm875, %v777, 0
      %v880 = vsel %vm875, %v780, 0
      %v883 = vsel %vm875, %v783, 0
      %v886 = vsel %vm875, %v786, 0
      %v889 = vsel %vm875, %v789, 0
      %v892 = vsel %vm875, %v792, 0
      %v895 = vsel %vm875, %v795, 0
      %v898 = vsel %vm875, %v798, 0
      %v901 = vsel %vm875, %v801, 0
      %v904 = vsel %vm875, %v804, 0
      %v907 = vsel %vm875, %v807, 0
      %v910 = vsel %vm875, %v810, 0
      %v913 = vsel %vm875, %v813, 0
      %v916 = vsel %vm875, %v816, 0
      %v919 = vsel %vm875, %v819, 0
      %v922 = vsel %vm875, %v822, 0
      %v925 = vsel %vm875, %v825, 0
      %v928 = vsel %vm875, %v828, 0
      %v931 = vsel %vm875, %v831, 0
      %v934 = vsel %vm875, %v834, 0
      %v937 = vsel %vm875, %v837, 0
      %v940 = vsel %vm875, %v840, 0
      %v943 = vsel %vm875, %v843, 0
      %v946 = vsel %vm875, %v846, 0
      %v949 = vsel %vm875, %v849, 0
      %v952 = vsel %vm875, %v852, 0
      %v955 = vsel %vm875, %v855, 0
      %v958 = vsel %vm875, %v858, 0
      %v961 = vsel %vm875, %v861, 0
      %v964 = vsel %vm875, %v864, 0
      %v967 = vsel %vm875, %v867, 0
      %v970 = vsel %vm875, %v870, 0
      %v973 = vsel %vm875, %v873, 0
      %vm975 = vcmask 1043456
      %v977 = vsel %vm975, 1.0, 0
      %979 = vmatpush.msra.mxu0 1.0
      %980 = vmatpush.msra.mxu0 1.0
      %981 = vmatpush.msra.mxu0 1.0
      %982 = vmatpush.msra.mxu0 1.0
      %983 = vmatpush.msra.mxu0 1.0
      %984 = vmatpush.msra.mxu0 1.0
      %985 = vmatpush.msra.mxu0 1.0
      %986 = vmatpush.msra.mxu0 1.0
      %987 = vmatpush.msra.mxu0 1.0
      %988 = vmatpush.msra.mxu0 1.0
      %989 = vmatpush.msra.mxu0 1.0
      %990 = vmatpush.msra.mxu0 1.0
      %991 = vmatpush.msra.mxu0 1.0
      %992 = vmatpush.msra.mxu0 1.0
      %993 = vmatpush.msra.mxu0 1.0
      %994 = vmatpush.msra.mxu0 1.0
      %995 = vmatmul.f32.gmra.mxu0 %v545
      %v996 = vpop.f32.mrf.mxu0
      %v997 = vadd.f32 0.0, %v996
      %998 = vmatmul.f32.gmra.mxu0 %v548
      %v999 = vpop.f32.mrf.mxu0
      %v1000 = vadd.f32 0.0, %v999
      %1001 = vmatmul.f32.gmra.mxu0 %v551
      %v1002 = vpop.f32.mrf.mxu0
      %v1003 = vadd.f32 0.0, %v1002
      %1004 = vmatmul.f32.gmra.mxu0 %v554
      %v1005 = vpop.f32.mrf.mxu0
      %v1006 = vadd.f32 0.0, %v1005
      %1007 = vmatmul.f32.gmra.mxu0 %v557
      %v1008 = vpop.f32.mrf.mxu0
      %v1009 = vadd.f32 0.0, %v1008
      %1010 = vmatmul.f32.gmra.mxu0 %v560
      %v1011 = vpop.f32.mrf.mxu0
      %v1012 = vadd.f32 0.0, %v1011
      %1013 = vmatmul.f32.gmra.mxu0 %v563
      %v1014 = vpop.f32.mrf.mxu0
      %v1015 = vadd.f32 0.0, %v1014
      %1016 = vmatmul.f32.gmra.mxu0 %v566
      %v1017 = vpop.f32.mrf.mxu0
      %v1018 = vadd.f32 0.0, %v1017
      %1019 = vmatmul.f32.gmra.mxu0 %v569
      %v1020 = vpop.f32.mrf.mxu0
      %v1021 = vadd.f32 0.0, %v1020
      %1022 = vmatmul.f32.gmra.mxu0 %v572
      %v1023 = vpop.f32.mrf.mxu0
      %v1024 = vadd.f32 0.0, %v1023
      %1025 = vmatmul.f32.gmra.mxu0 %v575
      %v1026 = vpop.f32.mrf.mxu0
      %v1027 = vadd.f32 0.0, %v1026
      %1028 = vmatmul.f32.gmra.mxu0 %v578
      %v1029 = vpop.f32.mrf.mxu0
      %v1030 = vadd.f32 0.0, %v1029
      %1031 = vmatmul.f32.gmra.mxu0 %v581
      %v1032 = vpop.f32.mrf.mxu0
      %v1033 = vadd.f32 0.0, %v1032
      %1034 = vmatmul.f32.gmra.mxu0 %v584
      %v1035 = vpop.f32.mrf.mxu0
      %v1036 = vadd.f32 0.0, %v1035
      %1037 = vmatmul.f32.gmra.mxu0 %v587
      %v1038 = vpop.f32.mrf.mxu0
      %v1039 = vadd.f32 0.0, %v1038
      %1040 = vmatmul.f32.gmra.mxu0 %v590
      %v1041 = vpop.f32.mrf.mxu0
      %v1042 = vadd.f32 0.0, %v1041
      %1043 = vmatmul.f32.gmra.mxu0 %v593
      %v1044 = vpop.f32.mrf.mxu0
      %v1045 = vadd.f32 0.0, %v1044
      %1046 = vmatmul.f32.gmra.mxu0 %v596
      %v1047 = vpop.f32.mrf.mxu0
      %v1048 = vadd.f32 0.0, %v1047
      %1049 = vmatmul.f32.gmra.mxu0 %v599
      %v1050 = vpop.f32.mrf.mxu0
      %v1051 = vadd.f32 0.0, %v1050
      %1052 = vmatmul.f32.gmra.mxu0 %v602
      %v1053 = vpop.f32.mrf.mxu0
      %v1054 = vadd.f32 0.0, %v1053
      %1055 = vmatmul.f32.gmra.mxu0 %v605
      %v1056 = vpop.f32.mrf.mxu0
      %v1057 = vadd.f32 0.0, %v1056
      %1058 = vmatmul.f32.gmra.mxu0 %v608
      %v1059 = vpop.f32.mrf.mxu0
      %v1060 = vadd.f32 0.0, %v1059
      %1061 = vmatmul.f32.gmra.mxu0 %v611
      %v1062 = vpop.f32.mrf.mxu0
      %v1063 = vadd.f32 0.0, %v1062
      %1064 = vmatmul.f32.gmra.mxu0 %v614
      %v1065 = vpop.f32.mrf.mxu0
      %v1066 = vadd.f32 0.0, %v1065
      %1067 = vmatmul.f32.gmra.mxu0 %v617
      %v1068 = vpop.f32.mrf.mxu0
      %v1069 = vadd.f32 0.0, %v1068
      %1070 = vmatmul.f32.gmra.mxu0 %v620
      %v1071 = vpop.f32.mrf.mxu0
      %v1072 = vadd.f32 0.0, %v1071
      %1073 = vmatmul.f32.gmra.mxu0 %v623
      %v1074 = vpop.f32.mrf.mxu0
      %v1075 = vadd.f32 0.0, %v1074
      %1076 = vmatmul.f32.gmra.mxu0 %v626
      %v1077 = vpop.f32.mrf.mxu0
      %v1078 = vadd.f32 0.0, %v1077
      %1079 = vmatmul.f32.gmra.mxu0 %v629
      %v1080 = vpop.f32.mrf.mxu0
      %v1081 = vadd.f32 0.0, %v1080
      %1082 = vmatmul.f32.gmra.mxu0 %v632
      %v1083 = vpop.f32.mrf.mxu0
      %v1084 = vadd.f32 0.0, %v1083
      %1085 = vmatmul.f32.gmra.mxu0 %v635
      %v1086 = vpop.f32.mrf.mxu0
      %v1087 = vadd.f32 0.0, %v1086
      %1088 = vmatmul.f32.gmra.mxu0 %v638
      %v1089 = vpop.f32.mrf.mxu0
      %v1090 = vadd.f32 0.0, %v1089
      %1091 = vmatmul.f32.gmra.mxu0 %v641
      %v1092 = vpop.f32.mrf.mxu0
      %v1093 = vadd.f32 0.0, %v1092
      %1094 = vdwg.mxu0
      %1095 = vmatpush.msra.mxu0 0.0
      %1096 = vmatpush.msra.mxu0 0.0
      %1097 = vmatpush.msra.mxu0 0.0
      %1098 = vmatpush.msra.mxu0 0.0
      %1099 = vmatpush.msra.mxu0 0.0
      %1100 = vmatpush.msra.mxu0 0.0
      %1101 = vmatpush.msra.mxu0 0.0
      %1102 = vmatpush.msra.mxu0 %v977
      %1103 = vmatpush.msra.mxu0 1.0
      %1104 = vmatpush.msra.mxu0 1.0
      %1105 = vmatpush.msra.mxu0 1.0
      %1106 = vmatpush.msra.mxu0 1.0
      %1107 = vmatpush.msra.mxu0 1.0
      %1108 = vmatpush.msra.mxu0 1.0
      %1109 = vmatpush.msra.mxu0 1.0
      %1110 = vmatpush.msra.mxu0 1.0
      %1111 = vmatmul.f32.gmra.mxu0 %v877
      %v1112 = vpop.f32.mrf.mxu0
      %v1113 = vadd.f32 %v997, %v1112
      %1114 = vmatmul.f32.gmra.mxu0 %v880
      %v1115 = vpop.f32.mrf.mxu0
      %v1116 = vadd.f32 %v1000, %v1115
      %1117 = vmatmul.f32.gmra.mxu0 %v883
      %v1118 = vpop.f32.mrf.mxu0
      %v1119 = vadd.f32 %v1003, %v1118
      %1120 = vmatmul.f32.gmra.mxu0 %v886
      %v1121 = vpop.f32.mrf.mxu0
      %v1122 = vadd.f32 %v1006, %v1121
      %1123 = vmatmul.f32.gmra.mxu0 %v889
      %v1124 = vpop.f32.mrf.mxu0
      %v1125 = vadd.f32 %v1009, %v1124
      %1126 = vmatmul.f32.gmra.mxu0 %v892
      %v1127 = vpop.f32.mrf.mxu0
      %v1128 = vadd.f32 %v1012, %v1127
      %1129 = vmatmul.f32.gmra.mxu0 %v895
      %v1130 = vpop.f32.mrf.mxu0
      %v1131 = vadd.f32 %v1015, %v1130
      %1132 = vmatmul.f32.gmra.mxu0 %v898
      %v1133 = vpop.f32.mrf.mxu0
      %v1134 = vadd.f32 %v1018, %v1133
      %1135 = vmatmul.f32.gmra.mxu0 %v901
      %v1136 = vpop.f32.mrf.mxu0
      %v1137 = vadd.f32 %v1021, %v1136
      %1138 = vmatmul.f32.gmra.mxu0 %v904
      %v1139 = vpop.f32.mrf.mxu0
      %v1140 = vadd.f32 %v1024, %v1139
      %1141 = vmatmul.f32.gmra.mxu0 %v907
      %v1142 = vpop.f32.mrf.mxu0
      %v1143 = vadd.f32 %v1027, %v1142
      %1144 = vmatmul.f32.gmra.mxu0 %v910
      %v1145 = vpop.f32.mrf.mxu0
      %v1146 = vadd.f32 %v1030, %v1145
      %1147 = vmatmul.f32.gmra.mxu0 %v913
      %v1148 = vpop.f32.mrf.mxu0
      %v1149 = vadd.f32 %v1033, %v1148
      %1150 = vmatmul.f32.gmra.mxu0 %v916
      %v1151 = vpop.f32.mrf.mxu0
      %v1152 = vadd.f32 %v1036, %v1151
      %1153 = vmatmul.f32.gmra.mxu0 %v919
      %v1154 = vpop.f32.mrf.mxu0
      %v1155 = vadd.f32 %v1039, %v1154
      %1156 = vmatmul.f32.gmra.mxu0 %v922
      %v1157 = vpop.f32.mrf.mxu0
      %v1158 = vadd.f32 %v1042, %v1157
      %1159 = vmatmul.f32.gmra.mxu0 %v925
      %v1160 = vpop.f32.mrf.mxu0
      %v1161 = vadd.f32 %v1045, %v1160
      %1162 = vmatmul.f32.gmra.mxu0 %v928
      %v1163 = vpop.f32.mrf.mxu0
      %v1164 = vadd.f32 %v1048, %v1163
      %1165 = vmatmul.f32.gmra.mxu0 %v931
      %v1166 = vpop.f32.mrf.mxu0
      %v1167 = vadd.f32 %v1051, %v1166
      %1168 = vmatmul.f32.gmra.mxu0 %v934
      %v1169 = vpop.f32.mrf.mxu0
      %v1170 = vadd.f32 %v1054, %v1169
      %1171 = vmatmul.f32.gmra.mxu0 %v937
      %v1172 = vpop.f32.mrf.mxu0
      %v1173 = vadd.f32 %v1057, %v1172
      %1174 = vmatmul.f32.gmra.mxu0 %v940
      %v1175 = vpop.f32.mrf.mxu0
      %v1176 = vadd.f32 %v1060, %v1175
      %1177 = vmatmul.f32.gmra.mxu0 %v943
      %v1178 = vpop.f32.mrf.mxu0
      %v1179 = vadd.f32 %v1063, %v1178
      %1180 = vmatmul.f32.gmra.mxu0 %v946
      %v1181 = vpop.f32.mrf.mxu0
      %v1182 = vadd.f32 %v1066, %v1181
      %1183 = vmatmul.f32.gmra.mxu0 %v949
      %v1184 = vpop.f32.mrf.mxu0
      %v1185 = vadd.f32 %v1069, %v1184
      %1186 = vmatmul.f32.gmra.mxu0 %v952
      %v1187 = vpop.f32.mrf.mxu0
      %v1188 = vadd.f32 %v1072, %v1187
      %1189 = vmatmul.f32.gmra.mxu0 %v955
      %v1190 = vpop.f32.mrf.mxu0
      %v1191 = vadd.f32 %v1075, %v1190
      %1192 = vmatmul.f32.gmra.mxu0 %v958
      %v1193 = vpop.f32.mrf.mxu0
      %v1194 = vadd.f32 %v1078, %v1193
      %1195 = vmatmul.f32.gmra.mxu0 %v961
      %v1196 = vpop.f32.mrf.mxu0
      %v1197 = vadd.f32 %v1081, %v1196
      %1198 = vmatmul.f32.gmra.mxu0 %v964
      %v1199 = vpop.f32.mrf.mxu0
      %v1200 = vadd.f32 %v1084, %v1199
      %1201 = vmatmul.f32.gmra.mxu0 %v967
      %v1202 = vpop.f32.mrf.mxu0
      %v1203 = vadd.f32 %v1087, %v1202
      %1204 = vmatmul.f32.gmra.mxu0 %v970
      %v1205 = vpop.f32.mrf.mxu0
      %v1206 = vadd.f32 %v1090, %v1205
      %1207 = vmatmul.f32.gmra.mxu0 %v973
      %v1208 = vpop.f32.mrf.mxu0
      %v1209 = vadd.f32 %v1093, %v1208
      %1210 = vdwg.mxu0
      %v1211 = vmul.f32 %v545, %v545
      %v1212 = vmul.f32 %v777, %v777
      %v1213 = vmul.f32 %v548, %v548
      %v1214 = vmul.f32 %v780, %v780
      %v1215 = vmul.f32 %v551, %v551
      %v1216 = vmul.f32 %v783, %v783
      %v1217 = vmul.f32 %v554, %v554
      %v1218 = vmul.f32 %v786, %v786
      %v1219 = vmul.f32 %v557, %v557
      %v1220 = vmul.f32 %v789, %v789
      %v1221 = vmul.f32 %v560, %v560
      %v1222 = vmul.f32 %v792, %v792
      %v1223 = vmul.f32 %v563, %v563
      %v1224 = vmul.f32 %v795, %v795
      %v1225 = vmul.f32 %v566, %v566
      %v1226 = vmul.f32 %v798, %v798
      %v1227 = vmul.f32 %v569, %v569
      %v1228 = vmul.f32 %v801, %v801
      %v1229 = vmul.f32 %v572, %v572
      %v1230 = vmul.f32 %v804, %v804
      %v1231 = vmul.f32 %v575, %v575
      %v1232 = vmul.f32 %v807, %v807
      %v1233 = vmul.f32 %v578, %v578
      %v1234 = vmul.f32 %v810, %v810
      %v1235 = vmul.f32 %v581, %v581
      %v1236 = vmul.f32 %v813, %v813
      %v1237 = vmul.f32 %v584, %v584
      %v1238 = vmul.f32 %v816, %v816
      %v1239 = vmul.f32 %v587, %v587
      %v1240 = vmul.f32 %v819, %v819
      %v1241 = vmul.f32 %v590, %v590
      %v1242 = vmul.f32 %v822, %v822
      %v1243 = vmul.f32 %v593, %v593
      %v1244 = vmul.f32 %v825, %v825
      %v1245 = vmul.f32 %v596, %v596
      %v1246 = vmul.f32 %v828, %v828
      %v1247 = vmul.f32 %v599, %v599
      %v1248 = vmul.f32 %v831, %v831
      %v1249 = vmul.f32 %v602, %v602
      %v1250 = vmul.f32 %v834, %v834
      %v1251 = vmul.f32 %v605, %v605
      %v1252 = vmul.f32 %v837, %v837
      %v1253 = vmul.f32 %v608, %v608
      %v1254 = vmul.f32 %v840, %v840
      %v1255 = vmul.f32 %v611, %v611
      %v1256 = vmul.f32 %v843, %v843
      %v1257 = vmul.f32 %v614, %v614
      %v1258 = vmul.f32 %v846, %v846
      %v1259 = vmul.f32 %v617, %v617
      %v1260 = vmul.f32 %v849, %v849
      %v1261 = vmul.f32 %v620, %v620
      %v1262 = vmul.f32 %v852, %v852
      %v1263 = vmul.f32 %v623, %v623
      %v1264 = vmul.f32 %v855, %v855
      %v1265 = vmul.f32 %v626, %v626
      %v1266 = vmul.f32 %v858, %v858
      %v1267 = vmul.f32 %v629, %v629
      %v1268 = vmul.f32 %v861, %v861
      %v1269 = vmul.f32 %v632, %v632
      %v1270 = vmul.f32 %v864, %v864
      %v1271 = vmul.f32 %v635, %v635
      %v1272 = vmul.f32 %v867, %v867
      %v1273 = vmul.f32 %v638, %v638
      %v1274 = vmul.f32 %v870, %v870
      %v1275 = vmul.f32 %v641, %v641
      %v1276 = vmul.f32 %v873, %v873
      %v1278 = vsel %vm875, %v1212, 0
      %v1281 = vsel %vm875, %v1214, 0
      %v1284 = vsel %vm875, %v1216, 0
      %v1287 = vsel %vm875, %v1218, 0
      %v1290 = vsel %vm875, %v1220, 0
      %v1293 = vsel %vm875, %v1222, 0
      %v1296 = vsel %vm875, %v1224, 0
      %v1299 = vsel %vm875, %v1226, 0
      %v1302 = vsel %vm875, %v1228, 0
      %v1305 = vsel %vm875, %v1230, 0
      %v1308 = vsel %vm875, %v1232, 0
      %v1311 = vsel %vm875, %v1234, 0
      %v1314 = vsel %vm875, %v1236, 0
      %v1317 = vsel %vm875, %v1238, 0
      %v1320 = vsel %vm875, %v1240, 0
      %v1323 = vsel %vm875, %v1242, 0
      %v1326 = vsel %vm875, %v1244, 0
      %v1329 = vsel %vm875, %v1246, 0
      %v1332 = vsel %vm875, %v1248, 0
      %v1335 = vsel %vm875, %v1250, 0
      %v1338 = vsel %vm875, %v1252, 0
      %v1341 = vsel %vm875, %v1254, 0
      %v1344 = vsel %vm875, %v1256, 0
      %v1347 = vsel %vm875, %v1258, 0
      %v1350 = vsel %vm875, %v1260, 0
      %v1353 = vsel %vm875, %v1262, 0
      %v1356 = vsel %vm875, %v1264, 0
      %v1359 = vsel %vm875, %v1266, 0
      %v1362 = vsel %vm875, %v1268, 0
      %v1365 = vsel %vm875, %v1270, 0
      %v1368 = vsel %vm875, %v1272, 0
      %v1371 = vsel %vm875, %v1274, 0
      %v1374 = vsel %vm875, %v1276, 0
      %1376 = vmatpush.msra.mxu0 1.0
      %1377 = vmatpush.msra.mxu0 1.0
      %1378 = vmatpush.msra.mxu0 1.0
      %1379 = vmatpush.msra.mxu0 1.0
      %1380 = vmatpush.msra.mxu0 1.0
      %1381 = vmatpush.msra.mxu0 1.0
      %1382 = vmatpush.msra.mxu0 1.0
      %1383 = vmatpush.msra.mxu0 1.0
      %1384 = vmatpush.msra.mxu0 1.0
      %1385 = vmatpush.msra.mxu0 1.0
      %1386 = vmatpush.msra.mxu0 1.0
      %1387 = vmatpush.msra.mxu0 1.0
      %1388 = vmatpush.msra.mxu0 1.0
      %1389 = vmatpush.msra.mxu0 1.0
      %1390 = vmatpush.msra.mxu0 1.0
      %1391 = vmatpush.msra.mxu0 1.0
      %1392 = vmatmul.f32.gmra.mxu0 %v1211
      %v1393 = vpop.f32.mrf.mxu0
      %v1394 = vadd.f32 0.0, %v1393
      %1395 = vmatmul.f32.gmra.mxu0 %v1213
      %v1396 = vpop.f32.mrf.mxu0
      %v1397 = vadd.f32 0.0, %v1396
      %1398 = vmatmul.f32.gmra.mxu0 %v1215
      %v1399 = vpop.f32.mrf.mxu0
      %v1400 = vadd.f32 0.0, %v1399
      %1401 = vmatmul.f32.gmra.mxu0 %v1217
      %v1402 = vpop.f32.mrf.mxu0
      %v1403 = vadd.f32 0.0, %v1402
      %1404 = vmatmul.f32.gmra.mxu0 %v1219
      %v1405 = vpop.f32.mrf.mxu0
      %v1406 = vadd.f32 0.0, %v1405
      %1407 = vmatmul.f32.gmra.mxu0 %v1221
      %v1408 = vpop.f32.mrf.mxu0
      %v1409 = vadd.f32 0.0, %v1408
      %1410 = vmatmul.f32.gmra.mxu0 %v1223
      %v1411 = vpop.f32.mrf.mxu0
      %v1412 = vadd.f32 0.0, %v1411
      %1413 = vmatmul.f32.gmra.mxu0 %v1225
      %v1414 = vpop.f32.mrf.mxu0
      %v1415 = vadd.f32 0.0, %v1414
      %1416 = vmatmul.f32.gmra.mxu0 %v1227
      %v1417 = vpop.f32.mrf.mxu0
      %v1418 = vadd.f32 0.0, %v1417
      %1419 = vmatmul.f32.gmra.mxu0 %v1229
      %v1420 = vpop.f32.mrf.mxu0
      %v1421 = vadd.f32 0.0, %v1420
      %1422 = vmatmul.f32.gmra.mxu0 %v1231
      %v1423 = vpop.f32.mrf.mxu0
      %v1424 = vadd.f32 0.0, %v1423
      %1425 = vmatmul.f32.gmra.mxu0 %v1233
      %v1426 = vpop.f32.mrf.mxu0
      %v1427 = vadd.f32 0.0, %v1426
      %1428 = vmatmul.f32.gmra.mxu0 %v1235
      %v1429 = vpop.f32.mrf.mxu0
      %v1430 = vadd.f32 0.0, %v1429
      %1431 = vmatmul.f32.gmra.mxu0 %v1237
      %v1432 = vpop.f32.mrf.mxu0
      %v1433 = vadd.f32 0.0, %v1432
      %1434 = vmatmul.f32.gmra.mxu0 %v1239
      %v1435 = vpop.f32.mrf.mxu0
      %v1436 = vadd.f32 0.0, %v1435
      %1437 = vmatmul.f32.gmra.mxu0 %v1241
      %v1438 = vpop.f32.mrf.mxu0
      %v1439 = vadd.f32 0.0, %v1438
      %1440 = vmatmul.f32.gmra.mxu0 %v1243
      %v1441 = vpop.f32.mrf.mxu0
      %v1442 = vadd.f32 0.0, %v1441
      %1443 = vmatmul.f32.gmra.mxu0 %v1245
      %v1444 = vpop.f32.mrf.mxu0
      %v1445 = vadd.f32 0.0, %v1444
      %1446 = vmatmul.f32.gmra.mxu0 %v1247
      %v1447 = vpop.f32.mrf.mxu0
      %v1448 = vadd.f32 0.0, %v1447
      %1449 = vmatmul.f32.gmra.mxu0 %v1249
      %v1450 = vpop.f32.mrf.mxu0
      %v1451 = vadd.f32 0.0, %v1450
      %1452 = vmatmul.f32.gmra.mxu0 %v1251
      %v1453 = vpop.f32.mrf.mxu0
      %v1454 = vadd.f32 0.0, %v1453
      %1455 = vmatmul.f32.gmra.mxu0 %v1253
      %v1456 = vpop.f32.mrf.mxu0
      %v1457 = vadd.f32 0.0, %v1456
      %1458 = vmatmul.f32.gmra.mxu0 %v1255
      %v1459 = vpop.f32.mrf.mxu0
      %v1460 = vadd.f32 0.0, %v1459
      %1461 = vmatmul.f32.gmra.mxu0 %v1257
      %v1462 = vpop.f32.mrf.mxu0
      %v1463 = vadd.f32 0.0, %v1462
      %1464 = vmatmul.f32.gmra.mxu0 %v1259
      %v1465 = vpop.f32.mrf.mxu0
      %v1466 = vadd.f32 0.0, %v1465
      %1467 = vmatmul.f32.gmra.mxu0 %v1261
      %v1468 = vpop.f32.mrf.mxu0
      %v1469 = vadd.f32 0.0, %v1468
      %1470 = vmatmul.f32.gmra.mxu0 %v1263
      %v1471 = vpop.f32.mrf.mxu0
      %v1472 = vadd.f32 0.0, %v1471
      %1473 = vmatmul.f32.gmra.mxu0 %v1265
      %v1474 = vpop.f32.mrf.mxu0
      %v1475 = vadd.f32 0.0, %v1474
      %1476 = vmatmul.f32.gmra.mxu0 %v1267
      %v1477 = vpop.f32.mrf.mxu0
      %v1478 = vadd.f32 0.0, %v1477
      %1479 = vmatmul.f32.gmra.mxu0 %v1269
      %v1480 = vpop.f32.mrf.mxu0
      %v1481 = vadd.f32 0.0, %v1480
      %1482 = vmatmul.f32.gmra.mxu0 %v1271
      %v1483 = vpop.f32.mrf.mxu0
      %v1484 = vadd.f32 0.0, %v1483
      %1485 = vmatmul.f32.gmra.mxu0 %v1273
      %v1486 = vpop.f32.mrf.mxu0
      %v1487 = vadd.f32 0.0, %v1486
      %1488 = vmatmul.f32.gmra.mxu0 %v1275
      %v1489 = vpop.f32.mrf.mxu0
      %v1490 = vadd.f32 0.0, %v1489
      %1491 = vdwg.mxu0
      %1492 = vmatpush.msra.mxu0 0.0
      %1493 = vmatpush.msra.mxu0 0.0
      %1494 = vmatpush.msra.mxu0 0.0
      %1495 = vmatpush.msra.mxu0 0.0
      %1496 = vmatpush.msra.mxu0 0.0
      %1497 = vmatpush.msra.mxu0 0.0
      %1498 = vmatpush.msra.mxu0 0.0
      %1499 = vmatpush.msra.mxu0 %v977
      %1500 = vmatpush.msra.mxu0 1.0
      %1501 = vmatpush.msra.mxu0 1.0
      %1502 = vmatpush.msra.mxu0 1.0
      %1503 = vmatpush.msra.mxu0 1.0
      %1504 = vmatpush.msra.mxu0 1.0
      %1505 = vmatpush.msra.mxu0 1.0
      %1506 = vmatpush.msra.mxu0 1.0
      %1507 = vmatpush.msra.mxu0 1.0
      %1508 = vmatmul.f32.gmra.mxu0 %v1278
      %v1509 = vpop.f32.mrf.mxu0
      %v1510 = vadd.f32 %v1394, %v1509
      %1511 = vmatmul.f32.gmra.mxu0 %v1281
      %v1512 = vpop.f32.mrf.mxu0
      %v1513 = vadd.f32 %v1397, %v1512
      %1514 = vmatmul.f32.gmra.mxu0 %v1284
      %v1515 = vpop.f32.mrf.mxu0
      %v1516 = vadd.f32 %v1400, %v1515
      %1517 = vmatmul.f32.gmra.mxu0 %v1287
      %v1518 = vpop.f32.mrf.mxu0
      %v1519 = vadd.f32 %v1403, %v1518
      %1520 = vmatmul.f32.gmra.mxu0 %v1290
      %v1521 = vpop.f32.mrf.mxu0
      %v1522 = vadd.f32 %v1406, %v1521
      %1523 = vmatmul.f32.gmra.mxu0 %v1293
      %v1524 = vpop.f32.mrf.mxu0
      %v1525 = vadd.f32 %v1409, %v1524
      %1526 = vmatmul.f32.gmra.mxu0 %v1296
      %v1527 = vpop.f32.mrf.mxu0
      %v1528 = vadd.f32 %v1412, %v1527
      %1529 = vmatmul.f32.gmra.mxu0 %v1299
      %v1530 = vpop.f32.mrf.mxu0
      %v1531 = vadd.f32 %v1415, %v1530
      %1532 = vmatmul.f32.gmra.mxu0 %v1302
      %v1533 = vpop.f32.mrf.mxu0
      %v1534 = vadd.f32 %v1418, %v1533
      %1535 = vmatmul.f32.gmra.mxu0 %v1305
      %v1536 = vpop.f32.mrf.mxu0
      %v1537 = vadd.f32 %v1421, %v1536
      %1538 = vmatmul.f32.gmra.mxu0 %v1308
      %v1539 = vpop.f32.mrf.mxu0
      %v1540 = vadd.f32 %v1424, %v1539
      %1541 = vmatmul.f32.gmra.mxu0 %v1311
      %v1542 = vpop.f32.mrf.mxu0
      %v1543 = vadd.f32 %v1427, %v1542
      %1544 = vmatmul.f32.gmra.mxu0 %v1314
      %v1545 = vpop.f32.mrf.mxu0
      %v1546 = vadd.f32 %v1430, %v1545
      %1547 = vmatmul.f32.gmra.mxu0 %v1317
      %v1548 = vpop.f32.mrf.mxu0
      %v1549 = vadd.f32 %v1433, %v1548
      %1550 = vmatmul.f32.gmra.mxu0 %v1320
      %v1551 = vpop.f32.mrf.mxu0
      %v1552 = vadd.f32 %v1436, %v1551
      %1553 = vmatmul.f32.gmra.mxu0 %v1323
      %v1554 = vpop.f32.mrf.mxu0
      %v1555 = vadd.f32 %v1439, %v1554
      %1556 = vmatmul.f32.gmra.mxu0 %v1326
      %v1557 = vpop.f32.mrf.mxu0
      %v1558 = vadd.f32 %v1442, %v1557
      %1559 = vmatmul.f32.gmra.mxu0 %v1329
      %v1560 = vpop.f32.mrf.mxu0
      %v1561 = vadd.f32 %v1445, %v1560
      %1562 = vmatmul.f32.gmra.mxu0 %v1332
      %v1563 = vpop.f32.mrf.mxu0
      %v1564 = vadd.f32 %v1448, %v1563
      %1565 = vmatmul.f32.gmra.mxu0 %v1335
      %v1566 = vpop.f32.mrf.mxu0
      %v1567 = vadd.f32 %v1451, %v1566
      %1568 = vmatmul.f32.gmra.mxu0 %v1338
      %v1569 = vpop.f32.mrf.mxu0
      %v1570 = vadd.f32 %v1454, %v1569
      %1571 = vmatmul.f32.gmra.mxu0 %v1341
      %v1572 = vpop.f32.mrf.mxu0
      %v1573 = vadd.f32 %v1457, %v1572
      %1574 = vmatmul.f32.gmra.mxu0 %v1344
      %v1575 = vpop.f32.mrf.mxu0
      %v1576 = vadd.f32 %v1460, %v1575
      %1577 = vmatmul.f32.gmra.mxu0 %v1347
      %v1578 = vpop.f32.mrf.mxu0
      %v1579 = vadd.f32 %v1463, %v1578
      %1580 = vmatmul.f32.gmra.mxu0 %v1350
      %v1581 = vpop.f32.mrf.mxu0
      %v1582 = vadd.f32 %v1466, %v1581
      %1583 = vmatmul.f32.gmra.mxu0 %v1353
      %v1584 = vpop.f32.mrf.mxu0
      %v1585 = vadd.f32 %v1469, %v1584
      %1586 = vmatmul.f32.gmra.mxu0 %v1356
      %v1587 = vpop.f32.mrf.mxu0
      %v1588 = vadd.f32 %v1472, %v1587
      %1589 = vmatmul.f32.gmra.mxu0 %v1359
      %v1590 = vpop.f32.mrf.mxu0
      %v1591 = vadd.f32 %v1475, %v1590
      %1592 = vmatmul.f32.gmra.mxu0 %v1362
      %v1593 = vpop.f32.mrf.mxu0
      %v1594 = vadd.f32 %v1478, %v1593
      %1595 = vmatmul.f32.gmra.mxu0 %v1365
      %v1596 = vpop.f32.mrf.mxu0
      %v1597 = vadd.f32 %v1481, %v1596
      %1598 = vmatmul.f32.gmra.mxu0 %v1368
      %v1599 = vpop.f32.mrf.mxu0
      %v1600 = vadd.f32 %v1484, %v1599
      %1601 = vmatmul.f32.gmra.mxu0 %v1371
      %v1602 = vpop.f32.mrf.mxu0
      %v1603 = vadd.f32 %v1487, %v1602
      %1604 = vmatmul.f32.gmra.mxu0 %v1374
      %v1605 = vpop.f32.mrf.mxu0
      %v1606 = vadd.f32 %v1490, %v1605
      %1607 = vdwg.mxu0
      %v1608 = vmul.f32 %v1113, 0.0051020407
      %v1609 = vmul.f32 %v1116, 0.0051020407
      %v1610 = vmul.f32 %v1119, 0.0051020407
      %v1611 = vmul.f32 %v1122, 0.0051020407
      %v1612 = vmul.f32 %v1125, 0.0051020407
      %v1613 = vmul.f32 %v1128, 0.0051020407
      %v1614 = vmul.f32 %v1131, 0.0051020407
      %v1615 = vmul.f32 %v1134, 0.0051020407
      %v1616 = vmul.f32 %v1137, 0.0051020407
      %v1617 = vmul.f32 %v1140, 0.0051020407
      %v1618 = vmul.f32 %v1143, 0.0051020407
      %v1619 = vmul.f32 %v1146, 0.0051020407
      %v1620 = vmul.f32 %v1149, 0.0051020407
      %v1621 = vmul.f32 %v1152, 0.0051020407
      %v1622 = vmul.f32 %v1155, 0.0051020407
      %v1623 = vmul.f32 %v1158, 0.0051020407
      %v1624 = vmul.f32 %v1161, 0.0051020407
      %v1625 = vmul.f32 %v1164, 0.0051020407
      %v1626 = vmul.f32 %v1167, 0.0051020407
      %v1627 = vmul.f32 %v1170, 0.0051020407
      %v1628 = vmul.f32 %v1173, 0.0051020407
      %v1629 = vmul.f32 %v1176, 0.0051020407
      %v1630 = vmul.f32 %v1179, 0.0051020407
      %v1631 = vmul.f32 %v1182, 0.0051020407
      %v1632 = vmul.f32 %v1185, 0.0051020407
      %v1633 = vmul.f32 %v1188, 0.0051020407
      %v1634 = vmul.f32 %v1191, 0.0051020407
      %v1635 = vmul.f32 %v1194, 0.0051020407
      %v1636 = vmul.f32 %v1197, 0.0051020407
      %v1637 = vmul.f32 %v1200, 0.0051020407
      %v1638 = vmul.f32 %v1203, 0.0051020407
      %v1639 = vmul.f32 %v1206, 0.0051020407
      %v1640 = vmul.f32 %v1209, 0.0051020407
      %v1641 = vmul.f32 %v1510, 0.0051020407
      %v1642 = vmul.f32 %v1513, 0.0051020407
      %v1643 = vmul.f32 %v1516, 0.0051020407
      %v1644 = vmul.f32 %v1519, 0.0051020407
      %v1645 = vmul.f32 %v1522, 0.0051020407
      %v1646 = vmul.f32 %v1525, 0.0051020407
      %v1647 = vmul.f32 %v1528, 0.0051020407
      %v1648 = vmul.f32 %v1531, 0.0051020407
      %v1649 = vmul.f32 %v1534, 0.0051020407
      %v1650 = vmul.f32 %v1537, 0.0051020407
      %v1651 = vmul.f32 %v1540, 0.0051020407
      %v1652 = vmul.f32 %v1543, 0.0051020407
      %v1653 = vmul.f32 %v1546, 0.0051020407
      %v1654 = vmul.f32 %v1549, 0.0051020407
      %v1655 = vmul.f32 %v1552, 0.0051020407
      %v1656 = vmul.f32 %v1555, 0.0051020407
      %v1657 = vmul.f32 %v1558, 0.0051020407
      %v1658 = vmul.f32 %v1561, 0.0051020407
      %v1659 = vmul.f32 %v1564, 0.0051020407
      %v1660 = vmul.f32 %v1567, 0.0051020407
      %v1661 = vmul.f32 %v1570, 0.0051020407
      %v1662 = vmul.f32 %v1573, 0.0051020407
      %v1663 = vmul.f32 %v1576, 0.0051020407
      %v1664 = vmul.f32 %v1579, 0.0051020407
      %v1665 = vmul.f32 %v1582, 0.0051020407
      %v1666 = vmul.f32 %v1585, 0.0051020407
      %v1667 = vmul.f32 %v1588, 0.0051020407
      %v1668 = vmul.f32 %v1591, 0.0051020407
      %v1669 = vmul.f32 %v1594, 0.0051020407
      %v1670 = vmul.f32 %v1597, 0.0051020407
      %v1671 = vmul.f32 %v1600, 0.0051020407
      %v1672 = vmul.f32 %v1603, 0.0051020407
      %v1673 = vmul.f32 %v1606, 0.0051020407
      %v1674 = vmul.f32 %v1608, %v1608
      %v1675 = vmul.f32 %v1609, %v1609
      %v1676 = vmul.f32 %v1610, %v1610
      %v1677 = vmul.f32 %v1611, %v1611
      %v1678 = vmul.f32 %v1612, %v1612
      %v1679 = vmul.f32 %v1613, %v1613
      %v1680 = vmul.f32 %v1614, %v1614
      %v1681 = vmul.f32 %v1615, %v1615
      %v1682 = vmul.f32 %v1616, %v1616
      %v1683 = vmul.f32 %v1617, %v1617
      %v1684 = vmul.f32 %v1618, %v1618
      %v1685 = vmul.f32 %v1619, %v1619
      %v1686 = vmul.f32 %v1620, %v1620
      %v1687 = vmul.f32 %v1621, %v1621
      %v1688 = vmul.f32 %v1622, %v1622
      %v1689 = vmul.f32 %v1623, %v1623
      %v1690 = vmul.f32 %v1624, %v1624
      %v1691 = vmul.f32 %v1625, %v1625
      %v1692 = vmul.f32 %v1626, %v1626
      %v1693 = vmul.f32 %v1627, %v1627
      %v1694 = vmul.f32 %v1628, %v1628
      %v1695 = vmul.f32 %v1629, %v1629
      %v1696 = vmul.f32 %v1630, %v1630
      %v1697 = vmul.f32 %v1631, %v1631
      %v1698 = vmul.f32 %v1632, %v1632
      %v1699 = vmul.f32 %v1633, %v1633
      %v1700 = vmul.f32 %v1634, %v1634
      %v1701 = vmul.f32 %v1635, %v1635
      %v1702 = vmul.f32 %v1636, %v1636
      %v1703 = vmul.f32 %v1637, %v1637
      %v1704 = vmul.f32 %v1638, %v1638
      %v1705 = vmul.f32 %v1639, %v1639
      %v1706 = vmul.f32 %v1640, %v1640
      %v1707 = vsub.f32 %v1641, %v1674
      %v1708 = vsub.f32 %v1642, %v1675
      %v1709 = vsub.f32 %v1643, %v1676
      %v1710 = vsub.f32 %v1644, %v1677
      %v1711 = vsub.f32 %v1645, %v1678
      %v1712 = vsub.f32 %v1646, %v1679
      %v1713 = vsub.f32 %v1647, %v1680
      %v1714 = vsub.f32 %v1648, %v1681
      %v1715 = vsub.f32 %v1649, %v1682
      %v1716 = vsub.f32 %v1650, %v1683
      %v1717 = vsub.f32 %v1651, %v1684
      %v1718 = vsub.f32 %v1652, %v1685
      %v1719 = vsub.f32 %v1653, %v1686
      %v1720 = vsub.f32 %v1654, %v1687
      %v1721 = vsub.f32 %v1655, %v1688
      %v1722 = vsub.f32 %v1656, %v1689
      %v1723 = vsub.f32 %v1657, %v1690
      %v1724 = vsub.f32 %v1658, %v1691
      %v1725 = vsub.f32 %v1659, %v1692
      %v1726 = vsub.f32 %v1660, %v1693
      %v1727 = vsub.f32 %v1661, %v1694
      %v1728 = vsub.f32 %v1662, %v1695
      %v1729 = vsub.f32 %v1663, %v1696
      %v1730 = vsub.f32 %v1664, %v1697
      %v1731 = vsub.f32 %v1665, %v1698
      %v1732 = vsub.f32 %v1666, %v1699
      %v1733 = vsub.f32 %v1667, %v1700
      %v1734 = vsub.f32 %v1668, %v1701
      %v1735 = vsub.f32 %v1669, %v1702
      %v1736 = vsub.f32 %v1670, %v1703
      %v1737 = vsub.f32 %v1671, %v1704
      %v1738 = vsub.f32 %v1672, %v1705
      %v1739 = vsub.f32 %v1673, %v1706
      %v1740 = vmax.f32 %v1707, 0.0
      %v1741 = vmax.f32 %v1708, 0.0
      %v1742 = vmax.f32 %v1709, 0.0
      %v1743 = vmax.f32 %v1710, 0.0
      %v1744 = vmax.f32 %v1711, 0.0
      %v1745 = vmax.f32 %v1712, 0.0
      %v1746 = vmax.f32 %v1713, 0.0
      %v1747 = vmax.f32 %v1714, 0.0
      %v1748 = vmax.f32 %v1715, 0.0
      %v1749 = vmax.f32 %v1716, 0.0
      %v1750 = vmax.f32 %v1717, 0.0
      %v1751 = vmax.f32 %v1718, 0.0
      %v1752 = vmax.f32 %v1719, 0.0
      %v1753 = vmax.f32 %v1720, 0.0
      %v1754 = vmax.f32 %v1721, 0.0
      %v1755 = vmax.f32 %v1722, 0.0
      %v1756 = vmax.f32 %v1723, 0.0
      %v1757 = vmax.f32 %v1724, 0.0
      %v1758 = vmax.f32 %v1725, 0.0
      %v1759 = vmax.f32 %v1726, 0.0
      %v1760 = vmax.f32 %v1727, 0.0
      %v1761 = vmax.f32 %v1728, 0.0
      %v1762 = vmax.f32 %v1729, 0.0
      %v1763 = vmax.f32 %v1730, 0.0
      %v1764 = vmax.f32 %v1731, 0.0
      %v1765 = vmax.f32 %v1732, 0.0
      %v1766 = vmax.f32 %v1733, 0.0
      %v1767 = vmax.f32 %v1734, 0.0
      %v1768 = vmax.f32 %v1735, 0.0
      %v1769 = vmax.f32 %v1736, 0.0
      %v1770 = vmax.f32 %v1737, 0.0
      %v1771 = vmax.f32 %v1738, 0.0
      %v1772 = vmax.f32 %v1739, 0.0
      %v1773 = vld [vmem:[%s192] sm:$0xff]
      %v1774 = vld [vmem:[%s192 + $0x8] sm:$0xff]
      %v1775 = vld [vmem:[%s192 + $0x10] sm:$0xff]
      %v1776 = vld [vmem:[%s192 + $0x18] sm:$0xff]
      %v1777 = vld [vmem:[%s192 + $0x20] sm:$0xff]
      %v1778 = vld [vmem:[%s192 + $0x28] sm:$0xff]
      %v1779 = vld [vmem:[%s192 + $0x30] sm:$0xff]
      %v1780 = vld [vmem:[%s192 + $0x38] sm:$0xff]
      %v1781 = vld [vmem:[%s192 + $0x40] sm:$0xff]
      %v1782 = vld [vmem:[%s192 + $0x48] sm:$0xff]
      %v1783 = vld [vmem:[%s192 + $0x50] sm:$0xff]
      %v1784 = vld [vmem:[%s192 + $0x58] sm:$0xff]
      %v1785 = vld [vmem:[%s192 + $0x60] sm:$0xff]
      %v1786 = vld [vmem:[%s192 + $0x68] sm:$0xff]
      %v1787 = vld [vmem:[%s192 + $0x70] sm:$0xff]
      %v1788 = vld [vmem:[%s192 + $0x78] sm:$0xff]
      %v1789 = vld [vmem:[%s192 + $0x80] sm:$0xff]
      %v1790 = vld [vmem:[%s192 + $0x88] sm:$0xff]
      %v1791 = vld [vmem:[%s192 + $0x90] sm:$0xff]
      %v1792 = vld [vmem:[%s192 + $0x98] sm:$0xff]
      %v1793 = vld [vmem:[%s192 + $0xa0] sm:$0xff]
      %v1794 = vld [vmem:[%s192 + $0xa8] sm:$0xff]
      %v1795 = vld [vmem:[%s192 + $0xb0] sm:$0xff]
      %v1796 = vld [vmem:[%s192 + $0xb8] sm:$0xff]
      %v1797 = vld [vmem:[%s192 + $0xc0] sm:$0xff]
      %v1798 = vld [vmem:[%s192 + $0xc8] sm:$0xff]
      %v1799 = vld [vmem:[%s192 + $0xd0] sm:$0xff]
      %v1800 = vld [vmem:[%s192 + $0xd8] sm:$0xff]
      %v1801 = vld [vmem:[%s192 + $0xe0] sm:$0xff]
      %v1802 = vld [vmem:[%s192 + $0xe8] sm:$0xff]
      %v1803 = vld [vmem:[%s192 + $0xf0] sm:$0xff]
      %v1804 = vld [vmem:[%s192 + $0xf8] sm:$0xff]
      %v1805 = vld [vmem:[%s192 + $0x100] sm:$0xff]
      %v1806 = vadd.f32 %v1740, 1e-05
      %v1807 = vadd.f32 %v1741, 1e-05
      %v1808 = vadd.f32 %v1742, 1e-05
      %v1809 = vadd.f32 %v1743, 1e-05
      %v1810 = vadd.f32 %v1744, 1e-05
      %v1811 = vadd.f32 %v1745, 1e-05
      %v1812 = vadd.f32 %v1746, 1e-05
      %v1813 = vadd.f32 %v1747, 1e-05
      %v1814 = vadd.f32 %v1748, 1e-05
      %v1815 = vadd.f32 %v1749, 1e-05
      %v1816 = vadd.f32 %v1750, 1e-05
      %v1817 = vadd.f32 %v1751, 1e-05
      %v1818 = vadd.f32 %v1752, 1e-05
      %v1819 = vadd.f32 %v1753, 1e-05
      %v1820 = vadd.f32 %v1754, 1e-05
      %v1821 = vadd.f32 %v1755, 1e-05
      %v1822 = vadd.f32 %v1756, 1e-05
      %v1823 = vadd.f32 %v1757, 1e-05
      %v1824 = vadd.f32 %v1758, 1e-05
      %v1825 = vadd.f32 %v1759, 1e-05
      %v1826 = vadd.f32 %v1760, 1e-05
      %v1827 = vadd.f32 %v1761, 1e-05
      %v1828 = vadd.f32 %v1762, 1e-05
      %v1829 = vadd.f32 %v1763, 1e-05
      %v1830 = vadd.f32 %v1764, 1e-05
      %v1831 = vadd.f32 %v1765, 1e-05
      %v1832 = vadd.f32 %v1766, 1e-05
      %v1833 = vadd.f32 %v1767, 1e-05
      %v1834 = vadd.f32 %v1768, 1e-05
      %v1835 = vadd.f32 %v1769, 1e-05
      %v1836 = vadd.f32 %v1770, 1e-05
      %v1837 = vadd.f32 %v1771, 1e-05
      %v1838 = vadd.f32 %v1772, 1e-05
      %v1839 = vrsqrt.pop %v1806
      %v1840 = vmul.f32 %v1839, %v1806
      %v1841 = vmul.f32 %v1840, %v1839
      %v1842 = vmul.f32 0.5, %v1841
      %v1843 = vsub.f32 1.5, %v1842
      %v1844 = vmul.f32 %v1839, %v1843
      %vm1845 = vweird.f32 %v1806
      %vm1846 = vweird.f32 %v1839
      %vm1847 = vmor %vm1845, %vm1846
      %v1848 = vsel %vm1847, %v1839, %v1844
      %v1849 = vrsqrt.pop %v1807
      %v1850 = vmul.f32 %v1849, %v1807
      %v1851 = vmul.f32 %v1850, %v1849
      %v1852 = vmul.f32 0.5, %v1851
      %v1853 = vsub.f32 1.5, %v1852
      %v1854 = vmul.f32 %v1849, %v1853
      %vm1855 = vweird.f32 %v1807
      %vm1856 = vweird.f32 %v1849
      %vm1857 = vmor %vm1855, %vm1856
      %v1858 = vsel %vm1857, %v1849, %v1854
      %v1859 = vrsqrt.pop %v1808
      %v1860 = vmul.f32 %v1859, %v1808
      %v1861 = vmul.f32 %v1860, %v1859
      %v1862 = vmul.f32 0.5, %v1861
      %v1863 = vsub.f32 1.5, %v1862
      %v1864 = vmul.f32 %v1859, %v1863
      %vm1865 = vweird.f32 %v1808
      %vm1866 = vweird.f32 %v1859
      %vm1867 = vmor %vm1865, %vm1866
      %v1868 = vsel %vm1867, %v1859, %v1864
      %v1869 = vrsqrt.pop %v1809
      %v1870 = vmul.f32 %v1869, %v1809
      %v1871 = vmul.f32 %v1870, %v1869
      %v1872 = vmul.f32 0.5, %v1871
      %v1873 = vsub.f32 1.5, %v1872
      %v1874 = vmul.f32 %v1869, %v1873
      %vm1875 = vweird.f32 %v1809
      %vm1876 = vweird.f32 %v1869
      %vm1877 = vmor %vm1875, %vm1876
      %v1878 = vsel %vm1877, %v1869, %v1874
      %v1879 = vrsqrt.pop %v1810
      %v1880 = vmul.f32 %v1879, %v1810
      %v1881 = vmul.f32 %v1880, %v1879
      %v1882 = vmul.f32 0.5, %v1881
      %v1883 = vsub.f32 1.5, %v1882
      %v1884 = vmul.f32 %v1879, %v1883
      %vm1885 = vweird.f32 %v1810
      %vm1886 = vweird.f32 %v1879
      %vm1887 = vmor %vm1885, %vm1886
      %v1888 = vsel %vm1887, %v1879, %v1884
      %v1889 = vrsqrt.pop %v1811
      %v1890 = vmul.f32 %v1889, %v1811
      %v1891 = vmul.f32 %v1890, %v1889
      %v1892 = vmul.f32 0.5, %v1891
      %v1893 = vsub.f32 1.5, %v1892
      %v1894 = vmul.f32 %v1889, %v1893
      %vm1895 = vweird.f32 %v1811
      %vm1896 = vweird.f32 %v1889
      %vm1897 = vmor %vm1895, %vm1896
      %v1898 = vsel %vm1897, %v1889, %v1894
      %v1899 = vrsqrt.pop %v1812
      %v1900 = vmul.f32 %v1899, %v1812
      %v1901 = vmul.f32 %v1900, %v1899
      %v1902 = vmul.f32 0.5, %v1901
      %v1903 = vsub.f32 1.5, %v1902
      %v1904 = vmul.f32 %v1899, %v1903
      %vm1905 = vweird.f32 %v1812
      %vm1906 = vweird.f32 %v1899
      %vm1907 = vmor %vm1905, %vm1906
      %v1908 = vsel %vm1907, %v1899, %v1904
      %v1909 = vrsqrt.pop %v1813
      %v1910 = vmul.f32 %v1909, %v1813
      %v1911 = vmul.f32 %v1910, %v1909
      %v1912 = vmul.f32 0.5, %v1911
      %v1913 = vsub.f32 1.5, %v1912
      %v1914 = vmul.f32 %v1909, %v1913
      %vm1915 = vweird.f32 %v1813
      %vm1916 = vweird.f32 %v1909
      %vm1917 = vmor %vm1915, %vm1916
      %v1918 = vsel %vm1917, %v1909, %v1914
      %v1919 = vrsqrt.pop %v1814
      %v1920 = vmul.f32 %v1919, %v1814
      %v1921 = vmul.f32 %v1920, %v1919
      %v1922 = vmul.f32 0.5, %v1921
      %v1923 = vsub.f32 1.5, %v1922
      %v1924 = vmul.f32 %v1919, %v1923
      %vm1925 = vweird.f32 %v1814
      %vm1926 = vweird.f32 %v1919
      %vm1927 = vmor %vm1925, %vm1926
      %v1928 = vsel %vm1927, %v1919, %v1924
      %v1929 = vrsqrt.pop %v1815
      %v1930 = vmul.f32 %v1929, %v1815
      %v1931 = vmul.f32 %v1930, %v1929
      %v1932 = vmul.f32 0.5, %v1931
      %v1933 = vsub.f32 1.5, %v1932
      %v1934 = vmul.f32 %v1929, %v1933
      %vm1935 = vweird.f32 %v1815
      %vm1936 = vweird.f32 %v1929
      %vm1937 = vmor %vm1935, %vm1936
      %v1938 = vsel %vm1937, %v1929, %v1934
      %v1939 = vrsqrt.pop %v1816
      %v1940 = vmul.f32 %v1939, %v1816
      %v1941 = vmul.f32 %v1940, %v1939
      %v1942 = vmul.f32 0.5, %v1941
      %v1943 = vsub.f32 1.5, %v1942
      %v1944 = vmul.f32 %v1939, %v1943
      %vm1945 = vweird.f32 %v1816
      %vm1946 = vweird.f32 %v1939
      %vm1947 = vmor %vm1945, %vm1946
      %v1948 = vsel %vm1947, %v1939, %v1944
      %v1949 = vrsqrt.pop %v1817
      %v1950 = vmul.f32 %v1949, %v1817
      %v1951 = vmul.f32 %v1950, %v1949
      %v1952 = vmul.f32 0.5, %v1951
      %v1953 = vsub.f32 1.5, %v1952
      %v1954 = vmul.f32 %v1949, %v1953
      %vm1955 = vweird.f32 %v1817
      %vm1956 = vweird.f32 %v1949
      %vm1957 = vmor %vm1955, %vm1956
      %v1958 = vsel %vm1957, %v1949, %v1954
      %v1959 = vrsqrt.pop %v1818
      %v1960 = vmul.f32 %v1959, %v1818
      %v1961 = vmul.f32 %v1960, %v1959
      %v1962 = vmul.f32 0.5, %v1961
      %v1963 = vsub.f32 1.5, %v1962
      %v1964 = vmul.f32 %v1959, %v1963
      %vm1965 = vweird.f32 %v1818
      %vm1966 = vweird.f32 %v1959
      %vm1967 = vmor %vm1965, %vm1966
      %v1968 = vsel %vm1967, %v1959, %v1964
      %v1969 = vrsqrt.pop %v1819
      %v1970 = vmul.f32 %v1969, %v1819
      %v1971 = vmul.f32 %v1970, %v1969
      %v1972 = vmul.f32 0.5, %v1971
      %v1973 = vsub.f32 1.5, %v1972
      %v1974 = vmul.f32 %v1969, %v1973
      %vm1975 = vweird.f32 %v1819
      %vm1976 = vweird.f32 %v1969
      %vm1977 = vmor %vm1975, %vm1976
      %v1978 = vsel %vm1977, %v1969, %v1974
      %v1979 = vrsqrt.pop %v1820
      %v1980 = vmul.f32 %v1979, %v1820
      %v1981 = vmul.f32 %v1980, %v1979
      %v1982 = vmul.f32 0.5, %v1981
      %v1983 = vsub.f32 1.5, %v1982
      %v1984 = vmul.f32 %v1979, %v1983
      %vm1985 = vweird.f32 %v1820
      %vm1986 = vweird.f32 %v1979
      %vm1987 = vmor %vm1985, %vm1986
      %v1988 = vsel %vm1987, %v1979, %v1984
      %v1989 = vrsqrt.pop %v1821
      %v1990 = vmul.f32 %v1989, %v1821
      %v1991 = vmul.f32 %v1990, %v1989
      %v1992 = vmul.f32 0.5, %v1991
      %v1993 = vsub.f32 1.5, %v1992
      %v1994 = vmul.f32 %v1989, %v1993
      %vm1995 = vweird.f32 %v1821
      %vm1996 = vweird.f32 %v1989
      %vm1997 = vmor %vm1995, %vm1996
      %v1998 = vsel %vm1997, %v1989, %v1994
      %v1999 = vrsqrt.pop %v1822
      %v2000 = vmul.f32 %v1999, %v1822
      %v2001 = vmul.f32 %v2000, %v1999
      %v2002 = vmul.f32 0.5, %v2001
      %v2003 = vsub.f32 1.5, %v2002
      %v2004 = vmul.f32 %v1999, %v2003
      %vm2005 = vweird.f32 %v1822
      %vm2006 = vweird.f32 %v1999
      %vm2007 = vmor %vm2005, %vm2006
      %v2008 = vsel %vm2007, %v1999, %v2004
      %v2009 = vrsqrt.pop %v1823
      %v2010 = vmul.f32 %v2009, %v1823
      %v2011 = vmul.f32 %v2010, %v2009
      %v2012 = vmul.f32 0.5, %v2011
      %v2013 = vsub.f32 1.5, %v2012
      %v2014 = vmul.f32 %v2009, %v2013
      %vm2015 = vweird.f32 %v1823
      %vm2016 = vweird.f32 %v2009
      %vm2017 = vmor %vm2015, %vm2016
      %v2018 = vsel %vm2017, %v2009, %v2014
      %v2019 = vrsqrt.pop %v1824
      %v2020 = vmul.f32 %v2019, %v1824
      %v2021 = vmul.f32 %v2020, %v2019
      %v2022 = vmul.f32 0.5, %v2021
      %v2023 = vsub.f32 1.5, %v2022
      %v2024 = vmul.f32 %v2019, %v2023
      %vm2025 = vweird.f32 %v1824
      %vm2026 = vweird.f32 %v2019
      %vm2027 = vmor %vm2025, %vm2026
      %v2028 = vsel %vm2027, %v2019, %v2024
      %v2029 = vrsqrt.pop %v1825
      %v2030 = vmul.f32 %v2029, %v1825
      %v2031 = vmul.f32 %v2030, %v2029
      %v2032 = vmul.f32 0.5, %v2031
      %v2033 = vsub.f32 1.5, %v2032
      %v2034 = vmul.f32 %v2029, %v2033
      %vm2035 = vweird.f32 %v1825
      %vm2036 = vweird.f32 %v2029
      %vm2037 = vmor %vm2035, %vm2036
      %v2038 = vsel %vm2037, %v2029, %v2034
      %v2039 = vrsqrt.pop %v1826
      %v2040 = vmul.f32 %v2039, %v1826
      %v2041 = vmul.f32 %v2040, %v2039
      %v2042 = vmul.f32 0.5, %v2041
      %v2043 = vsub.f32 1.5, %v2042
      %v2044 = vmul.f32 %v2039, %v2043
      %vm2045 = vweird.f32 %v1826
      %vm2046 = vweird.f32 %v2039
      %vm2047 = vmor %vm2045, %vm2046
      %v2048 = vsel %vm2047, %v2039, %v2044
      %v2049 = vrsqrt.pop %v1827
      %v2050 = vmul.f32 %v2049, %v1827
      %v2051 = vmul.f32 %v2050, %v2049
      %v2052 = vmul.f32 0.5, %v2051
      %v2053 = vsub.f32 1.5, %v2052
      %v2054 = vmul.f32 %v2049, %v2053
      %vm2055 = vweird.f32 %v1827
      %vm2056 = vweird.f32 %v2049
      %vm2057 = vmor %vm2055, %vm2056
      %v2058 = vsel %vm2057, %v2049, %v2054
      %v2059 = vrsqrt.pop %v1828
      %v2060 = vmul.f32 %v2059, %v1828
      %v2061 = vmul.f32 %v2060, %v2059
      %v2062 = vmul.f32 0.5, %v2061
      %v2063 = vsub.f32 1.5, %v2062
      %v2064 = vmul.f32 %v2059, %v2063
      %vm2065 = vweird.f32 %v1828
      %vm2066 = vweird.f32 %v2059
      %vm2067 = vmor %vm2065, %vm2066
      %v2068 = vsel %vm2067, %v2059, %v2064
      %v2069 = vrsqrt.pop %v1829
      %v2070 = vmul.f32 %v2069, %v1829
      %v2071 = vmul.f32 %v2070, %v2069
      %v2072 = vmul.f32 0.5, %v2071
      %v2073 = vsub.f32 1.5, %v2072
      %v2074 = vmul.f32 %v2069, %v2073
      %vm2075 = vweird.f32 %v1829
      %vm2076 = vweird.f32 %v2069
      %vm2077 = vmor %vm2075, %vm2076
      %v2078 = vsel %vm2077, %v2069, %v2074
      %v2079 = vrsqrt.pop %v1830
      %v2080 = vmul.f32 %v2079, %v1830
      %v2081 = vmul.f32 %v2080, %v2079
      %v2082 = vmul.f32 0.5, %v2081
      %v2083 = vsub.f32 1.5, %v2082
      %v2084 = vmul.f32 %v2079, %v2083
      %vm2085 = vweird.f32 %v1830
      %vm2086 = vweird.f32 %v2079
      %vm2087 = vmor %vm2085, %vm2086
      %v2088 = vsel %vm2087, %v2079, %v2084
      %v2089 = vrsqrt.pop %v1831
      %v2090 = vmul.f32 %v2089, %v1831
      %v2091 = vmul.f32 %v2090, %v2089
      %v2092 = vmul.f32 0.5, %v2091
      %v2093 = vsub.f32 1.5, %v2092
      %v2094 = vmul.f32 %v2089, %v2093
      %vm2095 = vweird.f32 %v1831
      %vm2096 = vweird.f32 %v2089
      %vm2097 = vmor %vm2095, %vm2096
      %v2098 = vsel %vm2097, %v2089, %v2094
      %v2099 = vrsqrt.pop %v1832
      %v2100 = vmul.f32 %v2099, %v1832
      %v2101 = vmul.f32 %v2100, %v2099
      %v2102 = vmul.f32 0.5, %v2101
      %v2103 = vsub.f32 1.5, %v2102
      %v2104 = vmul.f32 %v2099, %v2103
      %vm2105 = vweird.f32 %v1832
      %vm2106 = vweird.f32 %v2099
      %vm2107 = vmor %vm2105, %vm2106
      %v2108 = vsel %vm2107, %v2099, %v2104
      %v2109 = vrsqrt.pop %v1833
      %v2110 = vmul.f32 %v2109, %v1833
      %v2111 = vmul.f32 %v2110, %v2109
      %v2112 = vmul.f32 0.5, %v2111
      %v2113 = vsub.f32 1.5, %v2112
      %v2114 = vmul.f32 %v2109, %v2113
      %vm2115 = vweird.f32 %v1833
      %vm2116 = vweird.f32 %v2109
      %vm2117 = vmor %vm2115, %vm2116
      %v2118 = vsel %vm2117, %v2109, %v2114
      %v2119 = vrsqrt.pop %v1834
      %v2120 = vmul.f32 %v2119, %v1834
      %v2121 = vmul.f32 %v2120, %v2119
      %v2122 = vmul.f32 0.5, %v2121
      %v2123 = vsub.f32 1.5, %v2122
      %v2124 = vmul.f32 %v2119, %v2123
      %vm2125 = vweird.f32 %v1834
      %vm2126 = vweird.f32 %v2119
      %vm2127 = vmor %vm2125, %vm2126
      %v2128 = vsel %vm2127, %v2119, %v2124
      %v2129 = vrsqrt.pop %v1835
      %v2130 = vmul.f32 %v2129, %v1835
      %v2131 = vmul.f32 %v2130, %v2129
      %v2132 = vmul.f32 0.5, %v2131
      %v2133 = vsub.f32 1.5, %v2132
      %v2134 = vmul.f32 %v2129, %v2133
      %vm2135 = vweird.f32 %v1835
      %vm2136 = vweird.f32 %v2129
      %vm2137 = vmor %vm2135, %vm2136
      %v2138 = vsel %vm2137, %v2129, %v2134
      %v2139 = vrsqrt.pop %v1836
      %v2140 = vmul.f32 %v2139, %v1836
      %v2141 = vmul.f32 %v2140, %v2139
      %v2142 = vmul.f32 0.5, %v2141
      %v2143 = vsub.f32 1.5, %v2142
      %v2144 = vmul.f32 %v2139, %v2143
      %vm2145 = vweird.f32 %v1836
      %vm2146 = vweird.f32 %v2139
      %vm2147 = vmor %vm2145, %vm2146
      %v2148 = vsel %vm2147, %v2139, %v2144
      %v2149 = vrsqrt.pop %v1837
      %v2150 = vmul.f32 %v2149, %v1837
      %v2151 = vmul.f32 %v2150, %v2149
      %v2152 = vmul.f32 0.5, %v2151
      %v2153 = vsub.f32 1.5, %v2152
      %v2154 = vmul.f32 %v2149, %v2153
      %vm2155 = vweird.f32 %v1837
      %vm2156 = vweird.f32 %v2149
      %vm2157 = vmor %vm2155, %vm2156
      %v2158 = vsel %vm2157, %v2149, %v2154
      %v2159 = vrsqrt.pop %v1838
      %v2160 = vmul.f32 %v2159, %v1838
      %v2161 = vmul.f32 %v2160, %v2159
      %v2162 = vmul.f32 0.5, %v2161
      %v2163 = vsub.f32 1.5, %v2162
      %v2164 = vmul.f32 %v2159, %v2163
      %vm2165 = vweird.f32 %v1838
      %vm2166 = vweird.f32 %v2159
      %vm2167 = vmor %vm2165, %vm2166
      %v2168 = vsel %vm2167, %v2159, %v2164
      %v2169 = vmul.f32 %v1773, %v1848
      %v2170 = vmul.f32 %v1774, %v1858
      %v2171 = vmul.f32 %v1775, %v1868
      %v2172 = vmul.f32 %v1776, %v1878
      %v2173 = vmul.f32 %v1777, %v1888
      %v2174 = vmul.f32 %v1778, %v1898
      %v2175 = vmul.f32 %v1779, %v1908
      %v2176 = vmul.f32 %v1780, %v1918
      %v2177 = vmul.f32 %v1781, %v1928
      %v2178 = vmul.f32 %v1782, %v1938
      %v2179 = vmul.f32 %v1783, %v1948
      %v2180 = vmul.f32 %v1784, %v1958
      %v2181 = vmul.f32 %v1785, %v1968
      %v2182 = vmul.f32 %v1786, %v1978
      %v2183 = vmul.f32 %v1787, %v1988
      %v2184 = vmul.f32 %v1788, %v1998
      %v2185 = vmul.f32 %v1789, %v2008
      %v2186 = vmul.f32 %v1790, %v2018
      %v2187 = vmul.f32 %v1791, %v2028
      %v2188 = vmul.f32 %v1792, %v2038
      %v2189 = vmul.f32 %v1793, %v2048
      %v2190 = vmul.f32 %v1794, %v2058
      %v2191 = vmul.f32 %v1795, %v2068
      %v2192 = vmul.f32 %v1796, %v2078
      %v2193 = vmul.f32 %v1797, %v2088
      %v2194 = vmul.f32 %v1798, %v2098
      %v2195 = vmul.f32 %v1799, %v2108
      %v2196 = vmul.f32 %v1800, %v2118
      %v2197 = vmul.f32 %v1801, %v2128
      %v2198 = vmul.f32 %v1802, %v2138
      %v2199 = vmul.f32 %v1803, %v2148
      %v2200 = vmul.f32 %v1804, %v2158
      %v2201 = vmul.f32 %v1805, %v2168
      %v2202 = vmul.f32 %v1608, %v2169
      %v2203 = vmul.f32 %v1609, %v2170
      %v2204 = vmul.f32 %v1610, %v2171
      %v2205 = vmul.f32 %v1611, %v2172
      %v2206 = vmul.f32 %v1612, %v2173
      %v2207 = vmul.f32 %v1613, %v2174
      %v2208 = vmul.f32 %v1614, %v2175
      %v2209 = vmul.f32 %v1615, %v2176
      %v2210 = vmul.f32 %v1616, %v2177
      %v2211 = vmul.f32 %v1617, %v2178
      %v2212 = vmul.f32 %v1618, %v2179
      %v2213 = vmul.f32 %v1619, %v2180
      %v2214 = vmul.f32 %v1620, %v2181
      %v2215 = vmul.f32 %v1621, %v2182
      %v2216 = vmul.f32 %v1622, %v2183
      %v2217 = vmul.f32 %v1623, %v2184
      %v2218 = vmul.f32 %v1624, %v2185
      %v2219 = vmul.f32 %v1625, %v2186
      %v2220 = vmul.f32 %v1626, %v2187
      %v2221 = vmul.f32 %v1627, %v2188
      %v2222 = vmul.f32 %v1628, %v2189
      %v2223 = vmul.f32 %v1629, %v2190
      %v2224 = vmul.f32 %v1630, %v2191
      %v2225 = vmul.f32 %v1631, %v2192
      %v2226 = vmul.f32 %v1632, %v2193
      %v2227 = vmul.f32 %v1633, %v2194
      %v2228 = vmul.f32 %v1634, %v2195
      %v2229 = vmul.f32 %v1635, %v2196
      %v2230 = vmul.f32 %v1636, %v2197
      %v2231 = vmul.f32 %v1637, %v2198
      %v2232 = vmul.f32 %v1638, %v2199
      %v2233 = vmul.f32 %v1639, %v2200
      %v2234 = vmul.f32 %v1640, %v2201
      %2268 = vrot.lane.b32.xlu0 %v2202, 1
      %v2269 = vpop.permute.xlu0 %2268
      %2270 = vrot.lane.b32.xlu0 %v2203, 1
      %v2271 = vpop.permute.xlu0 %2270
      %2272 = vrot.lane.b32.xlu0 %v2204, 1
      %v2273 = vpop.permute.xlu0 %2272
      %2274 = vrot.lane.b32.xlu0 %v2205, 1
      %v2275 = vpop.permute.xlu0 %2274
      %2276 = vrot.lane.b32.xlu0 %v2206, 1
      %v2277 = vpop.permute.xlu0 %2276
      %2278 = vrot.lane.b32.xlu0 %v2207, 1
      %v2279 = vpop.permute.xlu0 %2278
      %2280 = vrot.lane.b32.xlu0 %v2208, 1
      %v2281 = vpop.permute.xlu0 %2280
      %2282 = vrot.lane.b32.xlu0 %v2209, 1
      %v2283 = vpop.permute.xlu0 %2282
      %2284 = vrot.lane.b32.xlu0 %v2210, 1
      %v2285 = vpop.permute.xlu0 %2284
      %2286 = vrot.lane.b32.xlu0 %v2211, 1
      %v2287 = vpop.permute.xlu0 %2286
      %2288 = vrot.lane.b32.xlu0 %v2212, 1
      %v2289 = vpop.permute.xlu0 %2288
      %2290 = vrot.lane.b32.xlu0 %v2213, 1
      %v2291 = vpop.permute.xlu0 %2290
      %2292 = vrot.lane.b32.xlu0 %v2214, 1
      %v2293 = vpop.permute.xlu0 %2292
      %2294 = vrot.lane.b32.xlu0 %v2215, 1
      %v2295 = vpop.permute.xlu0 %2294
      %2296 = vrot.lane.b32.xlu0 %v2216, 1
      %v2297 = vpop.permute.xlu0 %2296
      %2298 = vrot.lane.b32.xlu0 %v2217, 1
      %v2299 = vpop.permute.xlu0 %2298
      %2300 = vrot.lane.b32.xlu0 %v2218, 1
      %v2301 = vpop.permute.xlu0 %2300
      %2302 = vrot.lane.b32.xlu0 %v2219, 1
      %v2303 = vpop.permute.xlu0 %2302
      %2304 = vrot.lane.b32.xlu0 %v2220, 1
      %v2305 = vpop.permute.xlu0 %2304
      %2306 = vrot.lane.b32.xlu0 %v2221, 1
      %v2307 = vpop.permute.xlu0 %2306
      %2308 = vrot.lane.b32.xlu0 %v2222, 1
      %v2309 = vpop.permute.xlu0 %2308
      %2310 = vrot.lane.b32.xlu0 %v2223, 1
      %v2311 = vpop.permute.xlu0 %2310
      %2312 = vrot.lane.b32.xlu0 %v2224, 1
      %v2313 = vpop.permute.xlu0 %2312
      %2314 = vrot.lane.b32.xlu0 %v2225, 1
      %v2315 = vpop.permute.xlu0 %2314
      %2316 = vrot.lane.b32.xlu0 %v2226, 1
      %v2317 = vpop.permute.xlu0 %2316
      %2318 = vrot.lane.b32.xlu0 %v2227, 1
      %v2319 = vpop.permute.xlu0 %2318
      %2320 = vrot.lane.b32.xlu0 %v2228, 1
      %v2321 = vpop.permute.xlu0 %2320
      %2322 = vrot.lane.b32.xlu0 %v2229, 1
      %v2323 = vpop.permute.xlu0 %2322
      %2324 = vrot.lane.b32.xlu0 %v2230, 1
      %v2325 = vpop.permute.xlu0 %2324
      %2326 = vrot.lane.b32.xlu0 %v2231, 1
      %v2327 = vpop.permute.xlu0 %2326
      %2328 = vrot.lane.b32.xlu0 %v2232, 1
      %v2329 = vpop.permute.xlu0 %2328
      %2330 = vrot.lane.b32.xlu0 %v2233, 1
      %v2331 = vpop.permute.xlu0 %2330
      %2332 = vrot.lane.b32.xlu0 %v2234, 1
      %v2333 = vpop.permute.xlu0 %2332
      %v2367 = vsub.f32 %v1773, %v2269
      %v2368 = vsub.f32 %v1774, %v2271
      %v2369 = vsub.f32 %v1775, %v2273
      %v2370 = vsub.f32 %v1776, %v2275
      %v2371 = vsub.f32 %v1777, %v2277
      %v2372 = vsub.f32 %v1778, %v2279
      %v2373 = vsub.f32 %v1779, %v2281
      %v2374 = vsub.f32 %v1780, %v2283
      %v2375 = vsub.f32 %v1781, %v2285
      %v2376 = vsub.f32 %v1782, %v2287
      %v2377 = vsub.f32 %v1783, %v2289
      %v2378 = vsub.f32 %v1784, %v2291
      %v2379 = vsub.f32 %v1785, %v2293
      %v2380 = vsub.f32 %v1786, %v2295
      %v2381 = vsub.f32 %v1787, %v2297
      %v2382 = vsub.f32 %v1788, %v2299
      %v2383 = vsub.f32 %v1789, %v2301
      %v2384 = vsub.f32 %v1790, %v2303
      %v2385 = vsub.f32 %v1791, %v2305
      %v2386 = vsub.f32 %v1792, %v2307
      %v2387 = vsub.f32 %v1793, %v2309
      %v2388 = vsub.f32 %v1794, %v2311
      %v2389 = vsub.f32 %v1795, %v2313
      %v2390 = vsub.f32 %v1796, %v2315
      %v2391 = vsub.f32 %v1797, %v2317
      %v2392 = vsub.f32 %v1798, %v2319
      %v2393 = vsub.f32 %v1799, %v2321
      %v2394 = vsub.f32 %v1800, %v2323
      %v2395 = vsub.f32 %v1801, %v2325
      %v2396 = vsub.f32 %v1802, %v2327
      %v2397 = vsub.f32 %v1803, %v2329
      %v2398 = vsub.f32 %v1804, %v2331
      %v2399 = vsub.f32 %v1805, %v2333
      %2401 = vset.pattern.permute.xlu0 0
      %2402 = vperm.xlu0 %2401, %v2169
      %v2403 = vpop.permute.xlu0 %2402
      %2406 = vset.pattern.permute.xlu0 0
      %2407 = vperm.xlu0 %2406, %v2170
      %v2408 = vpop.permute.xlu0 %2407
      %2411 = vset.pattern.permute.xlu0 0
      %2412 = vperm.xlu0 %2411, %v2171
      %v2413 = vpop.permute.xlu0 %2412
      %2416 = vset.pattern.permute.xlu0 0
      %2417 = vperm.xlu0 %2416, %v2172
      %v2418 = vpop.permute.xlu0 %2417
      %2421 = vset.pattern.permute.xlu0 0
      %2422 = vperm.xlu0 %2421, %v2173
      %v2423 = vpop.permute.xlu0 %2422
      %2426 = vset.pattern.permute.xlu0 0
      %2427 = vperm.xlu0 %2426, %v2174
      %v2428 = vpop.permute.xlu0 %2427
      %2431 = vset.pattern.permute.xlu0 0
      %2432 = vperm.xlu0 %2431, %v2175
      %v2433 = vpop.permute.xlu0 %2432
      %2436 = vset.pattern.permute.xlu0 0
      %2437 = vperm.xlu0 %2436, %v2176
      %v2438 = vpop.permute.xlu0 %2437
      %2441 = vset.pattern.permute.xlu0 0
      %2442 = vperm.xlu0 %2441, %v2177
      %v2443 = vpop.permute.xlu0 %2442
      %2446 = vset.pattern.permute.xlu0 0
      %2447 = vperm.xlu0 %2446, %v2178
      %v2448 = vpop.permute.xlu0 %2447
      %2451 = vset.pattern.permute.xlu0 0
      %2452 = vperm.xlu0 %2451, %v2179
      %v2453 = vpop.permute.xlu0 %2452
      %2456 = vset.pattern.permute.xlu0 0
      %2457 = vperm.xlu0 %2456, %v2180
      %v2458 = vpop.permute.xlu0 %2457
      %2461 = vset.pattern.permute.xlu0 0
      %2462 = vperm.xlu0 %2461, %v2181
      %v2463 = vpop.permute.xlu0 %2462
      %2466 = vset.pattern.permute.xlu0 0
      %2467 = vperm.xlu0 %2466, %v2182
      %v2468 = vpop.permute.xlu0 %2467
      %2471 = vset.pattern.permute.xlu0 0
      %2472 = vperm.xlu0 %2471, %v2183
      %v2473 = vpop.permute.xlu0 %2472
      %2476 = vset.pattern.permute.xlu0 0
      %2477 = vperm.xlu0 %2476, %v2184
      %v2478 = vpop.permute.xlu0 %2477
      %2481 = vset.pattern.permute.xlu0 0
      %2482 = vperm.xlu0 %2481, %v2185
      %v2483 = vpop.permute.xlu0 %2482
      %2486 = vset.pattern.permute.xlu0 0
      %2487 = vperm.xlu0 %2486, %v2186
      %v2488 = vpop.permute.xlu0 %2487
      %2491 = vset.pattern.permute.xlu0 0
      %2492 = vperm.xlu0 %2491, %v2187
      %v2493 = vpop.permute.xlu0 %2492
      %2496 = vset.pattern.permute.xlu0 0
      %2497 = vperm.xlu0 %2496, %v2188
      %v2498 = vpop.permute.xlu0 %2497
      %2501 = vset.pattern.permute.xlu0 0
      %2502 = vperm.xlu0 %2501, %v2189
      %v2503 = vpop.permute.xlu0 %2502
      %2506 = vset.pattern.permute.xlu0 0
      %2507 = vperm.xlu0 %2506, %v2190
      %v2508 = vpop.permute.xlu0 %2507
      %2511 = vset.pattern.permute.xlu0 0
      %2512 = vperm.xlu0 %2511, %v2191
      %v2513 = vpop.permute.xlu0 %2512
      %2516 = vset.pattern.permute.xlu0 0
      %2517 = vperm.xlu0 %2516, %v2192
      %v2518 = vpop.permute.xlu0 %2517
      %2521 = vset.pattern.permute.xlu0 0
      %2522 = vperm.xlu0 %2521, %v2193
      %v2523 = vpop.permute.xlu0 %2522
      %2526 = vset.pattern.permute.xlu0 0
      %2527 = vperm.xlu0 %2526, %v2194
      %v2528 = vpop.permute.xlu0 %2527
      %2531 = vset.pattern.permute.xlu0 0
      %2532 = vperm.xlu0 %2531, %v2195
      %v2533 = vpop.permute.xlu0 %2532
      %2536 = vset.pattern.permute.xlu0 0
      %2537 = vperm.xlu0 %2536, %v2196
      %v2538 = vpop.permute.xlu0 %2537
      %2541 = vset.pattern.permute.xlu0 0
      %2542 = vperm.xlu0 %2541, %v2197
      %v2543 = vpop.permute.xlu0 %2542
      %2546 = vset.pattern.permute.xlu0 0
      %2547 = vperm.xlu0 %2546, %v2198
      %v2548 = vpop.permute.xlu0 %2547
      %2551 = vset.pattern.permute.xlu0 0
      %2552 = vperm.xlu0 %2551, %v2199
      %v2553 = vpop.permute.xlu0 %2552
      %2556 = vset.pattern.permute.xlu0 0
      %2557 = vperm.xlu0 %2556, %v2200
      %v2558 = vpop.permute.xlu0 %2557
      %2561 = vset.pattern.permute.xlu0 0
      %2562 = vperm.xlu0 %2561, %v2201
      %v2563 = vpop.permute.xlu0 %2562
      %v2565 = vmul.f32 %v545, %v2403
      %v2566 = vmul.f32 %v777, %v2403
      %v2567 = vmul.f32 %v548, %v2408
      %v2568 = vmul.f32 %v780, %v2408
      %v2569 = vmul.f32 %v551, %v2413
      %v2570 = vmul.f32 %v783, %v2413
      %v2571 = vmul.f32 %v554, %v2418
      %v2572 = vmul.f32 %v786, %v2418
      %v2573 = vmul.f32 %v557, %v2423
      %v2574 = vmul.f32 %v789, %v2423
      %v2575 = vmul.f32 %v560, %v2428
      %v2576 = vmul.f32 %v792, %v2428
      %v2577 = vmul.f32 %v563, %v2433
      %v2578 = vmul.f32 %v795, %v2433
      %v2579 = vmul.f32 %v566, %v2438
      %v2580 = vmul.f32 %v798, %v2438
      %v2581 = vmul.f32 %v569, %v2443
      %v2582 = vmul.f32 %v801, %v2443
      %v2583 = vmul.f32 %v572, %v2448
      %v2584 = vmul.f32 %v804, %v2448
      %v2585 = vmul.f32 %v575, %v2453
      %v2586 = vmul.f32 %v807, %v2453
      %v2587 = vmul.f32 %v578, %v2458
      %v2588 = vmul.f32 %v810, %v2458
      %v2589 = vmul.f32 %v581, %v2463
      %v2590 = vmul.f32 %v813, %v2463
      %v2591 = vmul.f32 %v584, %v2468
      %v2592 = vmul.f32 %v816, %v2468
      %v2593 = vmul.f32 %v587, %v2473
      %v2594 = vmul.f32 %v819, %v2473
      %v2595 = vmul.f32 %v590, %v2478
      %v2596 = vmul.f32 %v822, %v2478
      %v2597 = vmul.f32 %v593, %v2483
      %v2598 = vmul.f32 %v825, %v2483
      %v2599 = vmul.f32 %v596, %v2488
      %v2600 = vmul.f32 %v828, %v2488
      %v2601 = vmul.f32 %v599, %v2493
      %v2602 = vmul.f32 %v831, %v2493
      %v2603 = vmul.f32 %v602, %v2498
      %v2604 = vmul.f32 %v834, %v2498
      %v2605 = vmul.f32 %v605, %v2503
      %v2606 = vmul.f32 %v837, %v2503
      %v2607 = vmul.f32 %v608, %v2508
      %v2608 = vmul.f32 %v840, %v2508
      %v2609 = vmul.f32 %v611, %v2513
      %v2610 = vmul.f32 %v843, %v2513
      %v2611 = vmul.f32 %v614, %v2518
      %v2612 = vmul.f32 %v846, %v2518
      %v2613 = vmul.f32 %v617, %v2523
      %v2614 = vmul.f32 %v849, %v2523
      %v2615 = vmul.f32 %v620, %v2528
      %v2616 = vmul.f32 %v852, %v2528
      %v2617 = vmul.f32 %v623, %v2533
      %v2618 = vmul.f32 %v855, %v2533
      %v2619 = vmul.f32 %v626, %v2538
      %v2620 = vmul.f32 %v858, %v2538
      %v2621 = vmul.f32 %v629, %v2543
      %v2622 = vmul.f32 %v861, %v2543
      %v2623 = vmul.f32 %v632, %v2548
      %v2624 = vmul.f32 %v864, %v2548
      %v2625 = vmul.f32 %v635, %v2553
      %v2626 = vmul.f32 %v867, %v2553
      %v2627 = vmul.f32 %v638, %v2558
      %v2628 = vmul.f32 %v870, %v2558
      %v2629 = vmul.f32 %v641, %v2563
      %v2630 = vmul.f32 %v873, %v2563
      %2632 = vset.pattern.permute.xlu0 1
      %2633 = vperm.xlu0 %2632, %v2367
      %v2634 = vpop.permute.xlu0 %2633
      %2637 = vset.pattern.permute.xlu0 1
      %2638 = vperm.xlu0 %2637, %v2368
      %v2639 = vpop.permute.xlu0 %2638
      %2642 = vset.pattern.permute.xlu0 1
      %2643 = vperm.xlu0 %2642, %v2369
      %v2644 = vpop.permute.xlu0 %2643
      %2647 = vset.pattern.permute.xlu0 1
      %2648 = vperm.xlu0 %2647, %v2370
      %v2649 = vpop.permute.xlu0 %2648
      %2652 = vset.pattern.permute.xlu0 1
      %2653 = vperm.xlu0 %2652, %v2371
      %v2654 = vpop.permute.xlu0 %2653
      %2657 = vset.pattern.permute.xlu0 1
      %2658 = vperm.xlu0 %2657, %v2372
      %v2659 = vpop.permute.xlu0 %2658
      %2662 = vset.pattern.permute.xlu0 1
      %2663 = vperm.xlu0 %2662, %v2373
      %v2664 = vpop.permute.xlu0 %2663
      %2667 = vset.pattern.permute.xlu0 1
      %2668 = vperm.xlu0 %2667, %v2374
      %v2669 = vpop.permute.xlu0 %2668
      %2672 = vset.pattern.permute.xlu0 1
      %2673 = vperm.xlu0 %2672, %v2375
      %v2674 = vpop.permute.xlu0 %2673
      %2677 = vset.pattern.permute.xlu0 1
      %2678 = vperm.xlu0 %2677, %v2376
      %v2679 = vpop.permute.xlu0 %2678
      %2682 = vset.pattern.permute.xlu0 1
      %2683 = vperm.xlu0 %2682, %v2377
      %v2684 = vpop.permute.xlu0 %2683
      %2687 = vset.pattern.permute.xlu0 1
      %2688 = vperm.xlu0 %2687, %v2378
      %v2689 = vpop.permute.xlu0 %2688
      %2692 = vset.pattern.permute.xlu0 1
      %2693 = vperm.xlu0 %2692, %v2379
      %v2694 = vpop.permute.xlu0 %2693
      %2697 = vset.pattern.permute.xlu0 1
      %2698 = vperm.xlu0 %2697, %v2380
      %v2699 = vpop.permute.xlu0 %2698
      %2702 = vset.pattern.permute.xlu0 1
      %2703 = vperm.xlu0 %2702, %v2381
      %v2704 = vpop.permute.xlu0 %2703
      %2707 = vset.pattern.permute.xlu0 1
      %2708 = vperm.xlu0 %2707, %v2382
      %v2709 = vpop.permute.xlu0 %2708
      %2712 = vset.pattern.permute.xlu0 1
      %2713 = vperm.xlu0 %2712, %v2383
      %v2714 = vpop.permute.xlu0 %2713
      %2717 = vset.pattern.permute.xlu0 1
      %2718 = vperm.xlu0 %2717, %v2384
      %v2719 = vpop.permute.xlu0 %2718
      %2722 = vset.pattern.permute.xlu0 1
      %2723 = vperm.xlu0 %2722, %v2385
      %v2724 = vpop.permute.xlu0 %2723
      %2727 = vset.pattern.permute.xlu0 1
      %2728 = vperm.xlu0 %2727, %v2386
      %v2729 = vpop.permute.xlu0 %2728
      %2732 = vset.pattern.permute.xlu0 1
      %2733 = vperm.xlu0 %2732, %v2387
      %v2734 = vpop.permute.xlu0 %2733
      %2737 = vset.pattern.permute.xlu0 1
      %2738 = vperm.xlu0 %2737, %v2388
      %v2739 = vpop.permute.xlu0 %2738
      %2742 = vset.pattern.permute.xlu0 1
      %2743 = vperm.xlu0 %2742, %v2389
      %v2744 = vpop.permute.xlu0 %2743
      %2747 = vset.pattern.permute.xlu0 1
      %2748 = vperm.xlu0 %2747, %v2390
      %v2749 = vpop.permute.xlu0 %2748
      %2752 = vset.pattern.permute.xlu0 1
      %2753 = vperm.xlu0 %2752, %v2391
      %v2754 = vpop.permute.xlu0 %2753
      %2757 = vset.pattern.permute.xlu0 1
      %2758 = vperm.xlu0 %2757, %v2392
      %v2759 = vpop.permute.xlu0 %2758
      %2762 = vset.pattern.permute.xlu0 1
      %2763 = vperm.xlu0 %2762, %v2393
      %v2764 = vpop.permute.xlu0 %2763
      %2767 = vset.pattern.permute.xlu0 1
      %2768 = vperm.xlu0 %2767, %v2394
      %v2769 = vpop.permute.xlu0 %2768
      %2772 = vset.pattern.permute.xlu0 1
      %2773 = vperm.xlu0 %2772, %v2395
      %v2774 = vpop.permute.xlu0 %2773
      %2777 = vset.pattern.permute.xlu0 1
      %2778 = vperm.xlu0 %2777, %v2396
      %v2779 = vpop.permute.xlu0 %2778
      %2782 = vset.pattern.permute.xlu0 1
      %2783 = vperm.xlu0 %2782, %v2397
      %v2784 = vpop.permute.xlu0 %2783
      %2787 = vset.pattern.permute.xlu0 1
      %2788 = vperm.xlu0 %2787, %v2398
      %v2789 = vpop.permute.xlu0 %2788
      %2792 = vset.pattern.permute.xlu0 1
      %2793 = vperm.xlu0 %2792, %v2399
      %v2794 = vpop.permute.xlu0 %2793
      %v2796 = vadd.f32 %v2565, %v2634
      %v2797 = vadd.f32 %v2566, %v2634
      %v2798 = vadd.f32 %v2567, %v2639
      %v2799 = vadd.f32 %v2568, %v2639
      %v2800 = vadd.f32 %v2569, %v2644
      %v2801 = vadd.f32 %v2570, %v2644
      %v2802 = vadd.f32 %v2571, %v2649
      %v2803 = vadd.f32 %v2572, %v2649
      %v2804 = vadd.f32 %v2573, %v2654
      %v2805 = vadd.f32 %v2574, %v2654
      %v2806 = vadd.f32 %v2575, %v2659
      %v2807 = vadd.f32 %v2576, %v2659
      %v2808 = vadd.f32 %v2577, %v2664
      %v2809 = vadd.f32 %v2578, %v2664
      %v2810 = vadd.f32 %v2579, %v2669
      %v2811 = vadd.f32 %v2580, %v2669
      %v2812 = vadd.f32 %v2581, %v2674
      %v2813 = vadd.f32 %v2582, %v2674
      %v2814 = vadd.f32 %v2583, %v2679
      %v2815 = vadd.f32 %v2584, %v2679
      %v2816 = vadd.f32 %v2585, %v2684
      %v2817 = vadd.f32 %v2586, %v2684
      %v2818 = vadd.f32 %v2587, %v2689
      %v2819 = vadd.f32 %v2588, %v2689
      %v2820 = vadd.f32 %v2589, %v2694
      %v2821 = vadd.f32 %v2590, %v2694
      %v2822 = vadd.f32 %v2591, %v2699
      %v2823 = vadd.f32 %v2592, %v2699
      %v2824 = vadd.f32 %v2593, %v2704
      %v2825 = vadd.f32 %v2594, %v2704
      %v2826 = vadd.f32 %v2595, %v2709
      %v2827 = vadd.f32 %v2596, %v2709
      %v2828 = vadd.f32 %v2597, %v2714
      %v2829 = vadd.f32 %v2598, %v2714
      %v2830 = vadd.f32 %v2599, %v2719
      %v2831 = vadd.f32 %v2600, %v2719
      %v2832 = vadd.f32 %v2601, %v2724
      %v2833 = vadd.f32 %v2602, %v2724
      %v2834 = vadd.f32 %v2603, %v2729
      %v2835 = vadd.f32 %v2604, %v2729
      %v2836 = vadd.f32 %v2605, %v2734
      %v2837 = vadd.f32 %v2606, %v2734
      %v2838 = vadd.f32 %v2607, %v2739
      %v2839 = vadd.f32 %v2608, %v2739
      %v2840 = vadd.f32 %v2609, %v2744
      %v2841 = vadd.f32 %v2610, %v2744
      %v2842 = vadd.f32 %v2611, %v2749
      %v2843 = vadd.f32 %v2612, %v2749
      %v2844 = vadd.f32 %v2613, %v2754
      %v2845 = vadd.f32 %v2614, %v2754
      %v2846 = vadd.f32 %v2615, %v2759
      %v2847 = vadd.f32 %v2616, %v2759
      %v2848 = vadd.f32 %v2617, %v2764
      %v2849 = vadd.f32 %v2618, %v2764
      %v2850 = vadd.f32 %v2619, %v2769
      %v2851 = vadd.f32 %v2620, %v2769
      %v2852 = vadd.f32 %v2621, %v2774
      %v2853 = vadd.f32 %v2622, %v2774
      %v2854 = vadd.f32 %v2623, %v2779
      %v2855 = vadd.f32 %v2624, %v2779
      %v2856 = vadd.f32 %v2625, %v2784
      %v2857 = vadd.f32 %v2626, %v2784
      %v2858 = vadd.f32 %v2627, %v2789
      %v2859 = vadd.f32 %v2628, %v2789
      %v2860 = vadd.f32 %v2629, %v2794
      %v2861 = vadd.f32 %v2630, %v2794
      %2862 = vst [vmem:[%s199] sm:$0xff] %v2796
      %2863 = vst.msk [vmem:[%s199 + $0x8] sm:$0xff] %vm875, %v2797
      %2864 = vst [vmem:[%s199 + $0x10] sm:$0xff] %v2798
      %2865 = vst.msk [vmem:[%s199 + $0x18] sm:$0xff] %vm875, %v2799
      %2866 = vst [vmem:[%s199 + $0x20] sm:$0xff] %v2800
      %2867 = vst.msk [vmem:[%s199 + $0x28] sm:$0xff] %vm875, %v2801
      %2868 = vst [vmem:[%s199 + $0x30] sm:$0xff] %v2802
      %2869 = vst.msk [vmem:[%s199 + $0x38] sm:$0xff] %vm875, %v2803
      %2870 = vst [vmem:[%s199 + $0x40] sm:$0xff] %v2804
      %2871 = vst.msk [vmem:[%s199 + $0x48] sm:$0xff] %vm875, %v2805
      %2872 = vst [vmem:[%s199 + $0x50] sm:$0xff] %v2806
      %2873 = vst.msk [vmem:[%s199 + $0x58] sm:$0xff] %vm875, %v2807
      %2874 = vst [vmem:[%s199 + $0x60] sm:$0xff] %v2808
      %2875 = vst.msk [vmem:[%s199 + $0x68] sm:$0xff] %vm875, %v2809
      %2876 = vst [vmem:[%s199 + $0x70] sm:$0xff] %v2810
      %2877 = vst.msk [vmem:[%s199 + $0x78] sm:$0xff] %vm875, %v2811
      %2878 = vst [vmem:[%s199 + $0x80] sm:$0xff] %v2812
      %2879 = vst.msk [vmem:[%s199 + $0x88] sm:$0xff] %vm875, %v2813
      %2880 = vst [vmem:[%s199 + $0x90] sm:$0xff] %v2814
      %2881 = vst.msk [vmem:[%s199 + $0x98] sm:$0xff] %vm875, %v2815
      %2882 = vst [vmem:[%s199 + $0xa0] sm:$0xff] %v2816
      %2883 = vst.msk [vmem:[%s199 + $0xa8] sm:$0xff] %vm875, %v2817
      %2884 = vst [vmem:[%s199 + $0xb0] sm:$0xff] %v2818
      %2885 = vst.msk [vmem:[%s199 + $0xb8] sm:$0xff] %vm875, %v2819
      %2886 = vst [vmem:[%s199 + $0xc0] sm:$0xff] %v2820
      %2887 = vst.msk [vmem:[%s199 + $0xc8] sm:$0xff] %vm875, %v2821
      %2888 = vst [vmem:[%s199 + $0xd0] sm:$0xff] %v2822
      %2889 = vst.msk [vmem:[%s199 + $0xd8] sm:$0xff] %vm875, %v2823
      %2890 = vst [vmem:[%s199 + $0xe0] sm:$0xff] %v2824
      %2891 = vst.msk [vmem:[%s199 + $0xe8] sm:$0xff] %vm875, %v2825
      %2892 = vst [vmem:[%s199 + $0xf0] sm:$0xff] %v2826
      %2893 = vst.msk [vmem:[%s199 + $0xf8] sm:$0xff] %vm875, %v2827
      %2894 = vst [vmem:[%s199 + $0x100] sm:$0xff] %v2828
      %2895 = vst.msk [vmem:[%s199 + $0x108] sm:$0xff] %vm875, %v2829
      %2896 = vst [vmem:[%s199 + $0x110] sm:$0xff] %v2830
      %2897 = vst.msk [vmem:[%s199 + $0x118] sm:$0xff] %vm875, %v2831
      %2898 = vst [vmem:[%s199 + $0x120] sm:$0xff] %v2832
      %2899 = vst.msk [vmem:[%s199 + $0x128] sm:$0xff] %vm875, %v2833
      %2900 = vst [vmem:[%s199 + $0x130] sm:$0xff] %v2834
      %2901 = vst.msk [vmem:[%s199 + $0x138] sm:$0xff] %vm875, %v2835
      %2902 = vst [vmem:[%s199 + $0x140] sm:$0xff] %v2836
      %2903 = vst.msk [vmem:[%s199 + $0x148] sm:$0xff] %vm875, %v2837
      %2904 = vst [vmem:[%s199 + $0x150] sm:$0xff] %v2838
      %2905 = vst.msk [vmem:[%s199 + $0x158] sm:$0xff] %vm875, %v2839
      %2906 = vst [vmem:[%s199 + $0x160] sm:$0xff] %v2840
      %2907 = vst.msk [vmem:[%s199 + $0x168] sm:$0xff] %vm875, %v2841
      %2908 = vst [vmem:[%s199 + $0x170] sm:$0xff] %v2842
      %2909 = vst.msk [vmem:[%s199 + $0x178] sm:$0xff] %vm875, %v2843
      %2910 = vst [vmem:[%s199 + $0x180] sm:$0xff] %v2844
      %2911 = vst.msk [vmem:[%s199 + $0x188] sm:$0xff] %vm875, %v2845
      %2912 = vst [vmem:[%s199 + $0x190] sm:$0xff] %v2846
      %2913 = vst.msk [vmem:[%s199 + $0x198] sm:$0xff] %vm875, %v2847
      %2914 = vst [vmem:[%s199 + $0x1a0] sm:$0xff] %v2848
      %2915 = vst.msk [vmem:[%s199 + $0x1a8] sm:$0xff] %vm875, %v2849
      %2916 = vst [vmem:[%s199 + $0x1b0] sm:$0xff] %v2850
      %2917 = vst.msk [vmem:[%s199 + $0x1b8] sm:$0xff] %vm875, %v2851
      %2918 = vst [vmem:[%s199 + $0x1c0] sm:$0xff] %v2852
      %2919 = vst.msk [vmem:[%s199 + $0x1c8] sm:$0xff] %vm875, %v2853
      %2920 = vst [vmem:[%s199 + $0x1d0] sm:$0xff] %v2854
      %2921 = vst.msk [vmem:[%s199 + $0x1d8] sm:$0xff] %vm875, %v2855
      %2922 = vst [vmem:[%s199 + $0x1e0] sm:$0xff] %v2856
      %2923 = vst.msk [vmem:[%s199 + $0x1e8] sm:$0xff] %vm875, %v2857
      %2924 = vst [vmem:[%s199 + $0x1f0] sm:$0xff] %v2858
      %2925 = vst.msk [vmem:[%s199 + $0x1f8] sm:$0xff] %vm875, %v2859
      %2926 = vst [vmem:[%s199 + $0x200] sm:$0xff] %v2860
      %2927 = vst.msk [vmem:[%s199 + $0x208] sm:$0xff] %vm875, %v2861
      %s2928 = smul.u32 33, %s14
      %p2929 = scmp.lt.s32.totalorder %s2928, 131
      %s2930 = scalar_select %p2929, %s2928, 131
      %s2931 = smul.addr %s2930, 2
      %s2932 = smul.addr %s2931, 8
      %s2933 = scalar_lea.vmem %s3, %s2932
      // Predicated region
      $region33: #{tpu_custom_call.1} parent=31 // pred_check
        %p2934 = pneg %p105
      $region34: #{tpu_custom_call.1} parent=31 // pred_check_branch
        %2936 = sbr.rel (%p2934) target = $region36
      $region35: #{tpu_custom_call.1} parent=31 // pred_region
        %s2937 = smul.u32 33, %s14
      $region36: #{tpu_custom_call.1} parent=31 // pred_fallthru
        _
    $region32: #{tpu_custom_call.1} parent=5 // pred_fallthru
      _
    %p2938 = scmp.le.s32.totalorder 2, %s9
    // Predicated region
    $region37: #{tpu_custom_call.1} parent=5 // pred_check
      %p2939 = pneg %p2938
    $region38: #{tpu_custom_call.1} parent=5 // pred_check_branch
      %2941 = sbr.rel (%p2939) target = $region40
    $region39: #{tpu_custom_call.1} parent=5 // pred_region
      %s2942 = ssub.s32 %s9, 2
      // Predicated region
      $region41: #{tpu_custom_call.1} parent=39 // pred_check
        %p2943 = pneg %p111
      $region42: #{tpu_custom_call.1} parent=39 // pred_check_branch
        %2945 = sbr.rel (%p2943) target = $region44
      $region43: #{tpu_custom_call.1} parent=39 // pred_region
        %s2946 = smul.u32 33, %s15
        %p2947 = scmp.lt.s32.totalorder %s2946, 131
        %s2948 = scalar_select %p2947, %s2946, 131
        %s2949 = smul.addr %s2948, 2
        %s2950 = smul.addr %s2949, 8
        %s2951 = scalar_lea.vmem %s3, %s2950
      $region44: #{tpu_custom_call.1} parent=39 // pred_fallthru
        _
    $region40: #{tpu_custom_call.1} parent=5 // pred_fallthru
      _
  $region6: #{tpu_custom_call.1} parent=0 // loop_footer
    %s13 = sadd.s32 1, %s9
  $region7: #{tpu_custom_call.1} parent=0 // loop_footer_branch
    %8 = sbr.rel target = $region3
  $region8: #{tpu_custom_call.1} parent=0 // loop_exit
    _

</llo_original>
